<compile_context>
chip_gen: v5e
topology: v5e:2x2
jax: 0.10.0
libtpu: 0.0.40
codegen_flags: <defaults>
</compile_context>

<pallas_src>
import jax
import jax.numpy as jnp
from jax import lax
from jax.experimental import pallas as pl
from jax.experimental.pallas import tpu as pltpu

LANE = 128      # TPU lane width: channel dims are zero-padded to this.
SUB = 8         # sublane alignment for row offsets / block shapes.
NEG_INF = -1e30  # pad value for unused head-bias columns (softmax-neutral).


def _ceil_to(x, m):
    return ((x + m - 1) // m) * m


def _pad_axis_to(a, axis, size, value=0.0):
    if a.shape[axis] == size:
        return a
    pads = [(0, 0)] * a.ndim
    pads[axis] = (0, size - a.shape[axis])
    return jnp.pad(a, pads, constant_values=value)


# ----------------------------------------------------------------------------
# Fused kernel
# ----------------------------------------------------------------------------

def _make_tcn_kernel(*, K, dils, dims, has_ds, T_out, L_seg, pad_front, Bt,
                     compute_dtype, tap_concat):
    """Fused TemporalConvNet + Linear + Softmax.

    Activation layout: a 2-D (rows, channels) slab holding Bt sequences
    back-to-back; each sequence = [pad_front zero rows | T data | tail zeros]
    with L_seg % 8 == 0.  A layer with cumulative left-shift S holds rows for
    positions S .. Bt*L_seg; an in-kernel keep mask re-zeroes pre-sequence rows
    before every conv, reproducing per-layer causal zero padding.
    """
    nb = len(dils)

    def kernel(*refs):
        it = iter(refs)
        x_ref = next(it)
        blocks = []
        for i in range(nb):
            w1, b1, w2, b2 = next(it), next(it), next(it), next(it)
            wd, bd = (next(it), next(it)) if has_ds[i] else (None, None)
            blocks.append((w1, b1, w2, b2, wd, bd))
        lw_ref, lb_ref = next(it), next(it)
        o_ref = next(it)

        rows0 = Bt * L_seg
        # Within-sequence row position, computed once (one int column).
        pos = lax.broadcasted_iota(jnp.int32, (rows0, 1), 0)
        keep_full = (pos % L_seg) >= pad_front            # (rows0, 1) bool

        def mask_rows(v, shift):
            # Zero the per-sequence causal-pad rows (== per-layer zero padding).
            return jnp.where(keep_full[shift:shift + v.shape[0]], v,
                             jnp.zeros((), v.dtype))

        def causal_conv(hm, w_ref, b_ref, d, cin_p):
            # hm: (L, C) in compute dtype with pre-sequence rows already zeroed.
            # Output row j corresponds to input row j + (K-1)*d (valid causal conv).
            p = (K - 1) * d
            L_out = hm.shape[0] - p
            if tap_concat:
                # One wide MXU pass: K dilated taps lane-concatenated (M, K*C).
                taps = [hm[k * d:k * d + L_out, :] for k in range(K)]
                stacked = jnp.concatenate(taps, axis=-1) if K > 1 else taps[0]
                acc = jnp.dot(stacked, w_ref[...],
                              preferred_element_type=jnp.float32)
            else:
                # K accumulating thin matmuls (v5e / VMEM-relief path).
                w = w_ref[...]
                acc = jnp.dot(hm[:L_out, :], w[:cin_p, :],
                              preferred_element_type=jnp.float32)
                for k in range(1, K):
                    acc = acc + jnp.dot(hm[k * d:k * d + L_out, :],
                                        w[k * cin_p:(k + 1) * cin_p, :],
                                        preferred_element_type=jnp.float32)
            return acc + b_ref[...]

        h = x_ref[...]                                    # compute_dtype slab
        shift = 0                                         # rows dropped so far
        for i, (w1, b1, w2, b2, wd, bd) in enumerate(blocks):
            d = dils[i]
            p = (K - 1) * d
            cin_p, cout_p = dims[i]
            # conv1 -> relu (block 0: input pad rows are already exact zeros).
            hm = h if i == 0 else mask_rows(h, shift)
            c1 = causal_conv(hm, w1, b1, d, cin_p)
            c1 = jnp.maximum(c1, 0.0).astype(compute_dtype)
            # conv2 -> relu (locuslab: relu inside net, before the residual add).
            c1m = mask_rows(c1, shift + p)
            c2 = causal_conv(c1m, w2, b2, d, cout_p)
            c2 = jnp.maximum(c2, 0.0)                     # f32
            # Residual path: identity when channel counts match.
            res = h[2 * p:, :]
            if wd is not None:
                res = jnp.dot(res, wd[...],
                              preferred_element_type=jnp.float32) + bd[...]
            else:
                res = res.astype(jnp.float32)
            h = jnp.maximum(c2 + res, 0.0).astype(compute_dtype)
            shift += 2 * p

        # Head: Linear (lane-padded to 128 outputs) + EXACT softmax epilogue.
        logits = jnp.dot(h, lw_ref[...],
                         preferred_element_type=jnp.float32) + lb_ref[...]
        m = jnp.max(logits, axis=-1, keepdims=True)
        e = jnp.exp(logits - m)
        denom = jnp.sum(e, axis=-1, keepdims=True)
        probs = e * (1.0 / denom)       # exact normalization: rows sum to 1

        # Aligned per-sequence stores: sequence b's data starts at probs row
        # b*L_seg (multiple of 8); blocks are (T_out, 128) -> plain dense vst's.
        for b in range(Bt):
            r0 = b * L_seg
            o_ref[b] = probs[r0:r0 + T_out, :].astype(o_ref.dtype)

    return kernel


# ----------------------------------------------------------------------------
# Wrapper: host-side weight flattening / channel padding, BlockSpecs, tiling
# ----------------------------------------------------------------------------

def _auto_batch_tile(B, L_seg, c_max, K, itemsize, tap_concat, budget):
    # Rough live-activation bytes per sequence: h + masked operand (+ tap
    # concat) in compute dtype, plus ~3 f32 slabs (conv acc, c2+res, probs).
    width = (2 + (K if tap_concat else 1)) * itemsize + 3 * 4
    per_seq = L_seg * (c_max * width + LANE * 4)
    bt_vmem = max(1, int(budget) // int(per_seq))
    bt_grid = max(1, B // 4) if B >= 4 else 1     # keep >= 4 pipelined steps
    bt = int(min(bt_vmem, bt_grid, B))
    while B % bt:
        bt -= 1
    return bt


def _cost_estimate(M, K, chans_p, has_ds, o_pad, inputs, out_shape):
    flops = 0
    for i in range(len(has_ds)):
        cin_p, cout_p = chans_p[i], chans_p[i + 1]
        flops += 2 * M * K * cin_p * cout_p             # conv1
        flops += 2 * M * K * cout_p * cout_p            # conv2
        if has_ds[i]:
            flops += 2 * M * cin_p * cout_p             # 1x1 downsample
    flops += 2 * M * chans_p[-1] * o_pad                # linear head
    bytes_accessed = sum(int(a.size) * int(a.dtype.itemsize) for a in inputs)
    bytes_accessed += int(out_shape[0]) * int(out_shape[1]) * int(out_shape[2]) * 4
    return pl.CostEstimate(flops=int(flops),
                           transcendentals=int(M * o_pad),
                           bytes_accessed=int(bytes_accessed))


def tcn_forward(x, block_params, lin_w, lin_b, *, kernel_size,
                batch_tile=None, compute_dtype=jnp.bfloat16, tap_concat=True,
                vmem_limit_bytes=64 * 1024 * 1024):
    """x: (B, T, input_size) f32 -> (B, T, output_size) softmax probabilities."""
    B, T, c_in = x.shape
    nb = len(block_params)
    K = kernel_size
    dils = [2 ** i for i in range(nb)]                    # dilations=True schedule
    p_total = sum(2 * (K - 1) * d for d in dils)          # total causal left context

    # Per-sequence slab: [p_total zero rows | T data | tail zeros], sized so
    # L_seg % 8 == 0 and at least T_out rows survive after the final block.
    T_out = _ceil_to(T, SUB)
    pad_front = p_total
    L_seg = _ceil_to(pad_front + T_out, SUB)

    itemsize = jnp.dtype(compute_dtype).itemsize
    chans = [c_in] + [prm["w1"].shape[2] for prm in block_params]
    chans_p = [_ceil_to(c, LANE) for c in chans]
    n_out = lin_w.shape[-1]
    o_pad = _ceil_to(n_out, LANE)

    if batch_tile is None:
        batch_tile = _auto_batch_tile(B, L_seg, max(chans_p + [o_pad]), K,
                                      itemsize, tap_concat,
                                      budget=vmem_limit_bytes // 2)
    assert B % batch_tile == 0, "batch must be divisible by batch_tile"
    Bt = batch_tile
    n_tiles = B // Bt

    # ---- host prep: ONE pad/reshape of the network input, cast to compute dtype
    xp = _pad_axis_to(x.astype(jnp.float32), 2, chans_p[0])
    xp = jnp.pad(xp, ((0, 0), (pad_front, L_seg - pad_front - T), (0, 0)))
    xp = xp.reshape(B * L_seg, chans_p[0]).astype(compute_dtype)

    inputs = [xp]
    in_specs = [pl.BlockSpec((Bt * L_seg, chans_p[0]), lambda i: (i, 0))]

    def _full(a):    # small parameter array, fully resident each grid step.
        # NOTE: these are grid-invariant; Pallas only fetches them once, the
        # remaining cost is the second pipeline buffer's VMEM.
        return pl.BlockSpec(a.shape, lambda i, _n=a.ndim: (0,) * _n)

    has_ds, dims = [], []
    for li, prm in enumerate(block_params):
        _, cin, cout = prm["w1"].shape
        assert cin == chans[li]
        cin_p, cout_p = chans_p[li], chans_p[li + 1]
        # tap-major flattened conv weights: (K, Cin, Cout) -> (K*Cin_p, Cout_p)
        w1 = _pad_axis_to(_pad_axis_to(prm["w1"], 1, cin_p), 2, cout_p)
        w1 = w1.reshape(K * cin_p, cout_p).astype(compute_dtype)
        w2 = _pad_axis_to(_pad_axis_to(prm["w2"], 1, cout_p), 2, cout_p)
        w2 = w2.reshape(K * cout_p, cout_p).astype(compute_dtype)
        b1 = _pad_axis_to(prm["b1"].reshape(1, cout), 1, cout_p).astype(jnp.float32)
        b2 = _pad_axis_to(prm["b2"].reshape(1, cout), 1, cout_p).astype(jnp.float32)
        block_in = [w1, b1, w2, b2]
        ds = "wd" in prm
        has_ds.append(ds)
        dims.append((cin_p, cout_p))
        if ds:                                            # 1x1 downsample conv
            wd = _pad_axis_to(_pad_axis_to(prm["wd"], 0, cin_p), 1,
                              cout_p).astype(compute_dtype)
            bd = _pad_axis_to(prm["bd"].reshape(1, cout), 1,
                              cout_p).astype(jnp.float32)
            block_in += [wd, bd]
        inputs += block_in
        in_specs += [_full(a) for a in block_in]

    # Head: zero-pad weight outputs to 128 lanes; pad bias with -1e30 so the
    # padded logit columns vanish under softmax (exp -> 0, sums stay exact).
    lw = _pad_axis_to(_pad_axis_to(lin_w, 0, chans_p[-1]), 1,
                      o_pad).astype(compute_dtype)
    lb = _pad_axis_to(lin_b.reshape(1, n_out).astype(jnp.float32), 1, o_pad,
                      value=NEG_INF)
    inputs += [lw, lb]
    in_specs += [_full(lw), _full(lb)]

    kern = _make_tcn_kernel(K=K, dils=dils, dims=dims, has_ds=has_ds,
                            T_out=T_out, L_seg=L_seg, pad_front=pad_front,
                            Bt=Bt, compute_dtype=compute_dtype,
                            tap_concat=tap_concat)
    cost = _cost_estimate(B * L_seg, K, chans_p, has_ds, o_pad, inputs,
                          (B, T_out, o_pad))

    out = pl.pallas_call(
        kern,
        out_shape=jax.ShapeDtypeStruct((B, T_out, o_pad), jnp.float32),
        grid=(n_tiles,),
        in_specs=in_specs,
        out_specs=pl.BlockSpec((Bt, T_out, o_pad), lambda i: (i, 0, 0)),
        compiler_params=pltpu.CompilerParams(
            dimension_semantics=("parallel",),        # batch-tile axis -> 2 TCs
            vmem_limit_bytes=vmem_limit_bytes),
        cost_estimate=cost,
    )(*inputs)
    return out[:, :T, :n_out]                             # drop lane/row padding


# ----------------------------------------------------------------------------
# Deterministic parameter init (mirrors the module __init__ shapes)
# ----------------------------------------------------------------------------

def init_params(key, input_size, output_size, num_channels, kernel_size):
    block_params = []
    in_c = input_size
    for i, out_c in enumerate(num_channels):
        k = jax.random.fold_in(key, i)
        k1, k2, k3, k4, k5, k6 = jax.random.split(k, 6)
        prm = {
            # torch Conv1d weight is (Cout, Cin, K); stored tap-major (K, Cin, Cout)
            "w1": 0.2 * jax.random.normal(k1, (kernel_size, in_c, out_c), jnp.float32),
            "b1": 0.1 * jax.random.normal(k2, (out_c,), jnp.float32),
            "w2": 0.2 * jax.random.normal(k3, (kernel_size, out_c, out_c), jnp.float32),
            "b2": 0.1 * jax.random.normal(k4, (out_c,), jnp.float32),
        }
        if in_c != out_c:            # nn.Conv1d(in_c, out_c, 1) downsample
            prm["wd"] = 0.2 * jax.random.normal(k5, (in_c, out_c), jnp.float32)
            prm["bd"] = 0.1 * jax.random.normal(k6, (out_c,), jnp.float32)
        block_params.append(prm)
        in_c = out_c
    kl = jax.random.fold_in(key, 1000)
    kw, kb = jax.random.split(kl)
    lin_w = 0.2 * jax.random.normal(kw, (num_channels[-1], output_size), jnp.float32)
    lin_b = 0.1 * jax.random.normal(kb, (output_size,), jnp.float32)
    return block_params, lin_w, lin_b


# ----------------------------------------------------------------------------
# Pure-JAX reference (lax.conv_general_dilated) for correctness checking
# ----------------------------------------------------------------------------

def reference_forward(x, block_params, lin_w, lin_b, *, kernel_size):
    h = jnp.transpose(x, (0, 2, 1))                       # (B, C, T)
    for i, prm in enumerate(block_params):
        d = 2 ** i
        p = (kernel_size - 1) * d
        w1 = jnp.transpose(prm["w1"], (2, 1, 0))          # (Cout, Cin, K)
        c1 = lax.conv_general_dilated(h, w1, (1,), [(p, 0)], rhs_dilation=(d,),
                                      dimension_numbers=("NCH", "OIH", "NCH"))
        c1 = jax.nn.relu(c1 + prm["b1"][None, :, None])
        w2 = jnp.transpose(prm["w2"], (2, 1, 0))
        c2 = lax.conv_general_dilated(c1, w2, (1,), [(p, 0)], rhs_dilation=(d,),
                                      dimension_numbers=("NCH", "OIH", "NCH"))
        c2 = jax.nn.relu(c2 + prm["b2"][None, :, None])   # relu2 (locuslab)
        if "wd" in prm:
            res = jnp.einsum("bct,co->bot", h, prm["wd"]) + prm["bd"][None, :, None]
        else:
            res = h                                       # identity residual
        h = jax.nn.relu(c2 + res)
    o = jnp.transpose(h, (0, 2, 1))                       # (B, T, C_last)
    logits = o @ lin_w + lin_b
    return jax.nn.softmax(logits, axis=2)


# ----------------------------------------------------------------------------

if __name__ == "__main__":
    # Small config consistent with TCN(input_size, output_size, num_channels,
    # kernel_size, dropout, dilations=True)
    B, T = 4, 16
    input_size, output_size = 4, 5
    num_channels = [8, 8]      # block0: 4->8 (downsample), block1: 8->8 (identity skip)
    kernel_size = 3

    key = jax.random.PRNGKey(0)
    kx, kp = jax.random.split(key)
    x = jax.random.normal(kx, (B, T, input_size), jnp.float32)   # (batch, seq, features)
    block_params, lin_w, lin_b = init_params(kp, input_size, output_size,
                                             num_channels, kernel_size)

    ref = reference_forward(x, block_params, lin_w, lin_b, kernel_size=kernel_size)

    # f32 MXU operands: tight check vs the pure-JAX reference.
    out_f32 = jax.block_until_ready(
        tcn_forward(x, block_params, lin_w, lin_b, kernel_size=kernel_size,
                    compute_dtype=jnp.float32))
    assert out_f32.shape == (B, T, output_size)
    assert jnp.allclose(out_f32, ref, atol=2e-3, rtol=2e-3), "f32 path mismatch vs reference"
    assert jnp.allclose(jnp.sum(out_f32, axis=2), 1.0, atol=1e-4), "softmax rows must sum to 1"

    # Default bf16 activations/operands (fast MXU path), f32 accumulate + epilogue.
    out_bf16 = jax.block_until_ready(
        tcn_forward(x, block_params, lin_w, lin_b, kernel_size=kernel_size))
    assert out_bf16.shape == (B, T, output_size)
    assert float(jnp.max(jnp.abs(out_bf16 - ref))) < 7e-2, "bf16 path diverged"
    assert jnp.allclose(jnp.sum(out_bf16, axis=2), 1.0, atol=1e-4)

    # Per-tap accumulating-matmul variant (v5e / VMEM-relief path).
    out_split = jax.block_until_ready(
        tcn_forward(x, block_params, lin_w, lin_b, kernel_size=kernel_size,
                    compute_dtype=jnp.float32, tap_concat=False))
    assert jnp.allclose(out_split, ref, atol=2e-3, rtol=2e-3), "tap-split path mismatch"

    # Explicit larger batch tile (2 sequences per grid step) must match.
    out_bt2 = jax.block_until_ready(
        tcn_forward(x, block_params, lin_w, lin_b, kernel_size=kernel_size,
                    compute_dtype=jnp.float32, batch_tile=2))
    assert jnp.allclose(out_bt2, out_f32, atol=1e-5, rtol=1e-5), "batch_tile=2 mismatch"

    print("KERNEL_OK")
</pallas_src>

<mosaic_0001>
module attributes {stable_mosaic.version = 11 : i64} {
  func.func @kernel(%arg0: i32, %arg1: memref<32x128xf32, #tpu.memory_space<vmem>>, %arg2: memref<384x128xf32, #tpu.memory_space<vmem>>, %arg3: memref<1x128xf32, #tpu.memory_space<vmem>>, %arg4: memref<384x128xf32, #tpu.memory_space<vmem>>, %arg5: memref<1x128xf32, #tpu.memory_space<vmem>>, %arg6: memref<128x128xf32, #tpu.memory_space<vmem>>, %arg7: memref<1x128xf32, #tpu.memory_space<vmem>>, %arg8: memref<384x128xf32, #tpu.memory_space<vmem>>, %arg9: memref<1x128xf32, #tpu.memory_space<vmem>>, %arg10: memref<384x128xf32, #tpu.memory_space<vmem>>, %arg11: memref<1x128xf32, #tpu.memory_space<vmem>>, %arg12: memref<128x128xf32, #tpu.memory_space<vmem>>, %arg13: memref<1x128xf32, #tpu.memory_space<vmem>>, %arg14: memref<1x16x128xf32, #tpu.memory_space<vmem>>) attributes {dimension_semantics = [#tpu.dimension_semantics<parallel>], iteration_bounds = array<i64: 4>, scalar_prefetch = 0 : i64, scratch_operands = 0 : i64, tpu.core_type = #tpu.core_type<tc>, window_params = [{transform_indices = @transform_0, window_bounds = array<i64: 32, 128>}, {pipeline_mode = #tpu.pipeline_mode<synchronous>, transform_indices = @transform_1, window_bounds = array<i64: 384, 128>}, {pipeline_mode = #tpu.pipeline_mode<synchronous>, transform_indices = @transform_2, window_bounds = array<i64: 1, 128>}, {pipeline_mode = #tpu.pipeline_mode<synchronous>, transform_indices = @transform_3, window_bounds = array<i64: 384, 128>}, {pipeline_mode = #tpu.pipeline_mode<synchronous>, transform_indices = @transform_4, window_bounds = array<i64: 1, 128>}, {pipeline_mode = #tpu.pipeline_mode<synchronous>, transform_indices = @transform_5, window_bounds = array<i64: 128, 128>}, {pipeline_mode = #tpu.pipeline_mode<synchronous>, transform_indices = @transform_6, window_bounds = array<i64: 1, 128>}, {pipeline_mode = #tpu.pipeline_mode<synchronous>, transform_indices = @transform_7, window_bounds = array<i64: 384, 128>}, {pipeline_mode = #tpu.pipeline_mode<synchronous>, transform_indices = @transform_8, window_bounds = array<i64: 1, 128>}, {pipeline_mode = #tpu.pipeline_mode<synchronous>, transform_indices = @transform_9, window_bounds = array<i64: 384, 128>}, {pipeline_mode = #tpu.pipeline_mode<synchronous>, transform_indices = @transform_10, window_bounds = array<i64: 1, 128>}, {pipeline_mode = #tpu.pipeline_mode<synchronous>, transform_indices = @transform_11, window_bounds = array<i64: 128, 128>}, {pipeline_mode = #tpu.pipeline_mode<synchronous>, transform_indices = @transform_12, window_bounds = array<i64: 1, 128>}, {transform_indices = @transform_13, window_bounds = array<i64: 1, 16, 128>}]} {
    %0 = tpu.iota {dimensions = array<i32: 0>} : vector<32x1xi32>
    %c32_i32 = arith.constant 32 : i32
    %c0_i32 = arith.constant 0 : i32
    %1 = arith.cmpi eq, %c32_i32, %c0_i32 : i32
    %c1_i32 = arith.constant 1 : i32
    %2 = arith.select %1, %c1_i32, %c32_i32 : i32
    %3 = vector.broadcast %2 : i32 to vector<32x1xi32>
    %4 = arith.remsi %0, %3 : vector<32x1xi32>
    %c0_i32_0 = arith.constant 0 : i32
    %5 = vector.broadcast %c0_i32_0 : i32 to vector<32x1xi32>
    %6 = arith.cmpi ne, %4, %5 : vector<32x1xi32>
    %c0_i32_1 = arith.constant 0 : i32
    %7 = vector.broadcast %c0_i32_1 : i32 to vector<32x1xi32>
    %8 = arith.cmpi slt, %4, %7 : vector<32x1xi32>
    %c0_i32_2 = arith.constant 0 : i32
    %9 = arith.cmpi slt, %2, %c0_i32_2 : i32
    %10 = vector.broadcast %9 : i1 to vector<32x1xi1>
    %11 = vector.broadcast %10 : vector<32x1xi1> to vector<32x1xi1>
    %12 = arith.xori %8, %11 : vector<32x1xi1>
    %13 = arith.andi %12, %6 : vector<32x1xi1>
    %14 = vector.broadcast %2 : i32 to vector<32x1xi32>
    %15 = arith.addi %4, %14 : vector<32x1xi32>
    %16 = arith.select %13, %15, %4 : vector<32x1xi1>, vector<32x1xi32>
    %c12_i32 = arith.constant 12 : i32
    %17 = vector.broadcast %c12_i32 : i32 to vector<32x1xi32>
    %18 = arith.cmpi sge, %16, %17 : vector<32x1xi32>
    %c0 = arith.constant 0 : index
    %c0_3 = arith.constant 0 : index
    %19 = vector.load %arg1[%c0, %c0_3] : memref<32x128xf32, #tpu.memory_space<vmem>>, vector<32x128xf32>
    %20 = vector.extract_strided_slice %19 {offsets = [0, 0], sizes = [30, 128], strides = [1, 1]} : vector<32x128xf32> to vector<30x128xf32>
    %21 = vector.extract_strided_slice %19 {offsets = [1, 0], sizes = [30, 128], strides = [1, 1]} : vector<32x128xf32> to vector<30x128xf32>
    %22 = vector.extract_strided_slice %19 {offsets = [2, 0], sizes = [30, 128], strides = [1, 1]} : vector<32x128xf32> to vector<30x128xf32>
    %23 = tpu.concatenate %20, %21, %22 in 1 : vector<30x128xf32>, vector<30x128xf32>, vector<30x128xf32> -> vector<30x384xf32>
    %c0_4 = arith.constant 0 : index
    %c0_5 = arith.constant 0 : index
    %24 = vector.load %arg2[%c0_4, %c0_5] : memref<384x128xf32, #tpu.memory_space<vmem>>, vector<384x128xf32>
    %cst = arith.constant dense<0.000000e+00> : vector<30x128xf32>
    %25 = tpu.matmul %23, %24, %cst {dimension_numbers = #tpu.dot_dimension_numbers<[1], [0], [0], [1], [0, 0, 1, 1], [], []>} : vector<30x384xf32>, vector<384x128xf32>, vector<30x128xf32> -> vector<30x128xf32>
    %c0_6 = arith.constant 0 : index
    %c0_7 = arith.constant 0 : index
    %26 = vector.load %arg3[%c0_6, %c0_7] : memref<1x128xf32, #tpu.memory_space<vmem>>, vector<1x128xf32>
    %27 = vector.broadcast %26 : vector<1x128xf32> to vector<30x128xf32>
    %28 = arith.addf %25, %27 : vector<30x128xf32>
    %cst_8 = arith.constant 0.000000e+00 : f32
    %29 = vector.broadcast %cst_8 : f32 to vector<30x128xf32>
    %30 = arith.maximumf %28, %29 : vector<30x128xf32>
    %31 = vector.extract_strided_slice %18 {offsets = [2, 0], sizes = [30, 1], strides = [1, 1]} : vector<32x1xi1> to vector<30x1xi1>
    %cst_9 = arith.constant 0.000000e+00 : f32
    %32 = vector.shape_cast %31 : vector<30x1xi1> to vector<30x1xi1>
    %33 = vector.broadcast %32 : vector<30x1xi1> to vector<30x128xi1>
    %34 = vector.broadcast %cst_9 : f32 to vector<30x128xf32>
    %35 = arith.select %33, %30, %34 : vector<30x128xi1>, vector<30x128xf32>
    %36 = vector.extract_strided_slice %35 {offsets = [0, 0], sizes = [28, 128], strides = [1, 1]} : vector<30x128xf32> to vector<28x128xf32>
    %37 = vector.extract_strided_slice %35 {offsets = [1, 0], sizes = [28, 128], strides = [1, 1]} : vector<30x128xf32> to vector<28x128xf32>
    %38 = vector.extract_strided_slice %35 {offsets = [2, 0], sizes = [28, 128], strides = [1, 1]} : vector<30x128xf32> to vector<28x128xf32>
    %39 = tpu.concatenate %36, %37, %38 in 1 : vector<28x128xf32>, vector<28x128xf32>, vector<28x128xf32> -> vector<28x384xf32>
    %c0_10 = arith.constant 0 : index
    %c0_11 = arith.constant 0 : index
    %40 = vector.load %arg4[%c0_10, %c0_11] : memref<384x128xf32, #tpu.memory_space<vmem>>, vector<384x128xf32>
    %cst_12 = arith.constant dense<0.000000e+00> : vector<28x128xf32>
    %41 = tpu.matmul %39, %40, %cst_12 {dimension_numbers = #tpu.dot_dimension_numbers<[1], [0], [0], [1], [0, 0, 1, 1], [], []>} : vector<28x384xf32>, vector<384x128xf32>, vector<28x128xf32> -> vector<28x128xf32>
    %c0_13 = arith.constant 0 : index
    %c0_14 = arith.constant 0 : index
    %42 = vector.load %arg5[%c0_13, %c0_14] : memref<1x128xf32, #tpu.memory_space<vmem>>, vector<1x128xf32>
    %43 = vector.broadcast %42 : vector<1x128xf32> to vector<28x128xf32>
    %44 = arith.addf %41, %43 : vector<28x128xf32>
    %cst_15 = arith.constant 0.000000e+00 : f32
    %45 = vector.broadcast %cst_15 : f32 to vector<28x128xf32>
    %46 = arith.maximumf %44, %45 : vector<28x128xf32>
    %47 = vector.extract_strided_slice %19 {offsets = [4, 0], sizes = [28, 128], strides = [1, 1]} : vector<32x128xf32> to vector<28x128xf32>
    %c0_16 = arith.constant 0 : index
    %c0_17 = arith.constant 0 : index
    %48 = vector.load %arg6[%c0_16, %c0_17] : memref<128x128xf32, #tpu.memory_space<vmem>>, vector<128x128xf32>
    %cst_18 = arith.constant dense<0.000000e+00> : vector<28x128xf32>
    %49 = tpu.matmul %47, %48, %cst_18 {dimension_numbers = #tpu.dot_dimension_numbers<[1], [0], [0], [1], [0, 0, 1, 1], [], []>} : vector<28x128xf32>, vector<128x128xf32>, vector<28x128xf32> -> vector<28x128xf32>
    %c0_19 = arith.constant 0 : index
    %c0_20 = arith.constant 0 : index
    %50 = vector.load %arg7[%c0_19, %c0_20] : memref<1x128xf32, #tpu.memory_space<vmem>>, vector<1x128xf32>
    %51 = vector.broadcast %50 : vector<1x128xf32> to vector<28x128xf32>
    %52 = arith.addf %49, %51 : vector<28x128xf32>
    %53 = arith.addf %46, %52 : vector<28x128xf32>
    %cst_21 = arith.constant 0.000000e+00 : f32
    %54 = vector.broadcast %cst_21 : f32 to vector<28x128xf32>
    %55 = arith.maximumf %53, %54 : vector<28x128xf32>
    %56 = vector.extract_strided_slice %18 {offsets = [4, 0], sizes = [28, 1], strides = [1, 1]} : vector<32x1xi1> to vector<28x1xi1>
    %cst_22 = arith.constant 0.000000e+00 : f32
    %57 = vector.shape_cast %56 : vector<28x1xi1> to vector<28x1xi1>
    %58 = vector.broadcast %57 : vector<28x1xi1> to vector<28x128xi1>
    %59 = vector.broadcast %cst_22 : f32 to vector<28x128xf32>
    %60 = arith.select %58, %55, %59 : vector<28x128xi1>, vector<28x128xf32>
    %61 = vector.extract_strided_slice %60 {offsets = [0, 0], sizes = [24, 128], strides = [1, 1]} : vector<28x128xf32> to vector<24x128xf32>
    %62 = vector.extract_strided_slice %60 {offsets = [2, 0], sizes = [24, 128], strides = [1, 1]} : vector<28x128xf32> to vector<24x128xf32>
    %63 = vector.extract_strided_slice %60 {offsets = [4, 0], sizes = [24, 128], strides = [1, 1]} : vector<28x128xf32> to vector<24x128xf32>
    %64 = tpu.concatenate %61, %62, %63 in 1 : vector<24x128xf32>, vector<24x128xf32>, vector<24x128xf32> -> vector<24x384xf32>
    %c0_23 = arith.constant 0 : index
    %c0_24 = arith.constant 0 : index
    %65 = vector.load %arg8[%c0_23, %c0_24] : memref<384x128xf32, #tpu.memory_space<vmem>>, vector<384x128xf32>
    %cst_25 = arith.constant dense<0.000000e+00> : vector<24x128xf32>
    %66 = tpu.matmul %64, %65, %cst_25 {dimension_numbers = #tpu.dot_dimension_numbers<[1], [0], [0], [1], [0, 0, 1, 1], [], []>} : vector<24x384xf32>, vector<384x128xf32>, vector<24x128xf32> -> vector<24x128xf32>
    %c0_26 = arith.constant 0 : index
    %c0_27 = arith.constant 0 : index
    %67 = vector.load %arg9[%c0_26, %c0_27] : memref<1x128xf32, #tpu.memory_space<vmem>>, vector<1x128xf32>
    %68 = vector.broadcast %67 : vector<1x128xf32> to vector<24x128xf32>
    %69 = arith.addf %66, %68 : vector<24x128xf32>
    %cst_28 = arith.constant 0.000000e+00 : f32
    %70 = vector.broadcast %cst_28 : f32 to vector<24x128xf32>
    %71 = arith.maximumf %69, %70 : vector<24x128xf32>
    %72 = vector.extract_strided_slice %18 {offsets = [8, 0], sizes = [24, 1], strides = [1, 1]} : vector<32x1xi1> to vector<24x1xi1>
    %cst_29 = arith.constant 0.000000e+00 : f32
    %73 = vector.shape_cast %72 : vector<24x1xi1> to vector<24x1xi1>
    %74 = vector.broadcast %73 : vector<24x1xi1> to vector<24x128xi1>
    %75 = vector.broadcast %cst_29 : f32 to vector<24x128xf32>
    %76 = arith.select %74, %71, %75 : vector<24x128xi1>, vector<24x128xf32>
    %77 = vector.extract_strided_slice %76 {offsets = [0, 0], sizes = [20, 128], strides = [1, 1]} : vector<24x128xf32> to vector<20x128xf32>
    %78 = vector.extract_strided_slice %76 {offsets = [2, 0], sizes = [20, 128], strides = [1, 1]} : vector<24x128xf32> to vector<20x128xf32>
    %79 = vector.extract_strided_slice %76 {offsets = [4, 0], sizes = [20, 128], strides = [1, 1]} : vector<24x128xf32> to vector<20x128xf32>
    %80 = tpu.concatenate %77, %78, %79 in 1 : vector<20x128xf32>, vector<20x128xf32>, vector<20x128xf32> -> vector<20x384xf32>
    %c0_30 = arith.constant 0 : index
    %c0_31 = arith.constant 0 : index
    %81 = vector.load %arg10[%c0_30, %c0_31] : memref<384x128xf32, #tpu.memory_space<vmem>>, vector<384x128xf32>
    %cst_32 = arith.constant dense<0.000000e+00> : vector<20x128xf32>
    %82 = tpu.matmul %80, %81, %cst_32 {dimension_numbers = #tpu.dot_dimension_numbers<[1], [0], [0], [1], [0, 0, 1, 1], [], []>} : vector<20x384xf32>, vector<384x128xf32>, vector<20x128xf32> -> vector<20x128xf32>
    %c0_33 = arith.constant 0 : index
    %c0_34 = arith.constant 0 : index
    %83 = vector.load %arg11[%c0_33, %c0_34] : memref<1x128xf32, #tpu.memory_space<vmem>>, vector<1x128xf32>
    %84 = vector.broadcast %83 : vector<1x128xf32> to vector<20x128xf32>
    %85 = arith.addf %82, %84 : vector<20x128xf32>
    %cst_35 = arith.constant 0.000000e+00 : f32
    %86 = vector.broadcast %cst_35 : f32 to vector<20x128xf32>
    %87 = arith.maximumf %85, %86 : vector<20x128xf32>
    %88 = vector.extract_strided_slice %55 {offsets = [8, 0], sizes = [20, 128], strides = [1, 1]} : vector<28x128xf32> to vector<20x128xf32>
    %89 = arith.addf %87, %88 : vector<20x128xf32>
    %cst_36 = arith.constant 0.000000e+00 : f32
    %90 = vector.broadcast %cst_36 : f32 to vector<20x128xf32>
    %91 = arith.maximumf %89, %90 : vector<20x128xf32>
    %c0_37 = arith.constant 0 : index
    %c0_38 = arith.constant 0 : index
    %92 = vector.load %arg12[%c0_37, %c0_38] : memref<128x128xf32, #tpu.memory_space<vmem>>, vector<128x128xf32>
    %cst_39 = arith.constant dense<0.000000e+00> : vector<20x128xf32>
    %93 = tpu.matmul %91, %92, %cst_39 {dimension_numbers = #tpu.dot_dimension_numbers<[1], [0], [0], [1], [0, 0, 1, 1], [], []>} : vector<20x128xf32>, vector<128x128xf32>, vector<20x128xf32> -> vector<20x128xf32>
    %c0_40 = arith.constant 0 : index
    %c0_41 = arith.constant 0 : index
    %94 = vector.load %arg13[%c0_40, %c0_41] : memref<1x128xf32, #tpu.memory_space<vmem>>, vector<1x128xf32>
    %95 = vector.broadcast %94 : vector<1x128xf32> to vector<20x128xf32>
    %96 = arith.addf %93, %95 : vector<20x128xf32>
    %cst_42 = arith.constant dense<0xFF800000> : vector<20xf32>
    %97 = vector.multi_reduction <maximumf>, %96, %cst_42 [1] : vector<20x128xf32> to vector<20xf32>
    %98 = vector.shape_cast %97 : vector<20xf32> to vector<20x1xf32>
    %99 = vector.broadcast %98 : vector<20x1xf32> to vector<20x128xf32>
    %100 = arith.subf %96, %99 : vector<20x128xf32>
    %101 = math.exp %100 : vector<20x128xf32>
    %cst_43 = arith.constant dense<0.000000e+00> : vector<20xf32>
    %102 = vector.multi_reduction <add>, %101, %cst_43 [1] : vector<20x128xf32> to vector<20xf32>
    %103 = vector.shape_cast %102 : vector<20xf32> to vector<20x1xf32>
    %cst_44 = arith.constant 1.000000e+00 : f32
    %104 = vector.broadcast %cst_44 : f32 to vector<20x1xf32>
    %105 = arith.divf %104, %103 : vector<20x1xf32>
    %106 = vector.broadcast %105 : vector<20x1xf32> to vector<20x128xf32>
    %107 = arith.mulf %101, %106 : vector<20x128xf32>
    %108 = vector.extract_strided_slice %107 {offsets = [0, 0], sizes = [16, 128], strides = [1, 1]} : vector<20x128xf32> to vector<16x128xf32>
    %c0_45 = arith.constant 0 : index
    %c0_46 = arith.constant 0 : index
    %c0_47 = arith.constant 0 : index
    %109 = vector.load %arg14[%c0_45, %c0_46, %c0_47] : memref<1x16x128xf32, #tpu.memory_space<vmem>>, vector<1x16x128xf32>
    %110 = vector.shape_cast %109 : vector<1x16x128xf32> to vector<16x128xf32>
    %111 = vector.shape_cast %108 : vector<16x128xf32> to vector<1x16x128xf32>
    tpu.vector_store %arg14[%c0_45, %c0_46, %c0_47], %111 {strides = array<i32>} : memref<1x16x128xf32, #tpu.memory_space<vmem>>, vector<1x16x128xf32>,
    return
  }
  func.func @transform_0(%arg0: i32) -> (i32, i32) {
    %c0_i32 = arith.constant 0 : i32
    %c0_i32_0 = arith.constant 0 : i32
    return %arg0, %c0_i32 : i32, i32
  }
  func.func @transform_1(%arg0: i32) -> (i32, i32) {
    %c0_i32 = arith.constant 0 : i32
    %c0_i32_0 = arith.constant 0 : i32
    %c0_i32_1 = arith.constant 0 : i32
    return %c0_i32, %c0_i32_0 : i32, i32
  }
  func.func @transform_2(%arg0: i32) -> (i32, i32) {
    %c0_i32 = arith.constant 0 : i32
    %c0_i32_0 = arith.constant 0 : i32
    %c0_i32_1 = arith.constant 0 : i32
    return %c0_i32, %c0_i32_0 : i32, i32
  }
  func.func @transform_3(%arg0: i32) -> (i32, i32) {
    %c0_i32 = arith.constant 0 : i32
    %c0_i32_0 = arith.constant 0 : i32
    %c0_i32_1 = arith.constant 0 : i32
    return %c0_i32, %c0_i32_0 : i32, i32
  }
  func.func @transform_4(%arg0: i32) -> (i32, i32) {
    %c0_i32 = arith.constant 0 : i32
    %c0_i32_0 = arith.constant 0 : i32
    %c0_i32_1 = arith.constant 0 : i32
    return %c0_i32, %c0_i32_0 : i32, i32
  }
  func.func @transform_5(%arg0: i32) -> (i32, i32) {
    %c0_i32 = arith.constant 0 : i32
    %c0_i32_0 = arith.constant 0 : i32
    %c0_i32_1 = arith.constant 0 : i32
    return %c0_i32, %c0_i32_0 : i32, i32
  }
  func.func @transform_6(%arg0: i32) -> (i32, i32) {
    %c0_i32 = arith.constant 0 : i32
    %c0_i32_0 = arith.constant 0 : i32
    %c0_i32_1 = arith.constant 0 : i32
    return %c0_i32, %c0_i32_0 : i32, i32
  }
  func.func @transform_7(%arg0: i32) -> (i32, i32) {
    %c0_i32 = arith.constant 0 : i32
    %c0_i32_0 = arith.constant 0 : i32
    %c0_i32_1 = arith.constant 0 : i32
    return %c0_i32, %c0_i32_0 : i32, i32
  }
  func.func @transform_8(%arg0: i32) -> (i32, i32) {
    %c0_i32 = arith.constant 0 : i32
    %c0_i32_0 = arith.constant 0 : i32
    %c0_i32_1 = arith.constant 0 : i32
    return %c0_i32, %c0_i32_0 : i32, i32
  }
  func.func @transform_9(%arg0: i32) -> (i32, i32) {
    %c0_i32 = arith.constant 0 : i32
    %c0_i32_0 = arith.constant 0 : i32
    %c0_i32_1 = arith.constant 0 : i32
    return %c0_i32, %c0_i32_0 : i32, i32
  }
  func.func @transform_10(%arg0: i32) -> (i32, i32) {
    %c0_i32 = arith.constant 0 : i32
    %c0_i32_0 = arith.constant 0 : i32
    %c0_i32_1 = arith.constant 0 : i32
    return %c0_i32, %c0_i32_0 : i32, i32
  }
  func.func @transform_11(%arg0: i32) -> (i32, i32) {
    %c0_i32 = arith.constant 0 : i32
    %c0_i32_0 = arith.constant 0 : i32
    %c0_i32_1 = arith.constant 0 : i32
    return %c0_i32, %c0_i32_0 : i32, i32
  }
  func.func @transform_12(%arg0: i32) -> (i32, i32) {
    %c0_i32 = arith.constant 0 : i32
    %c0_i32_0 = arith.constant 0 : i32
    %c0_i32_1 = arith.constant 0 : i32
    return %c0_i32, %c0_i32_0 : i32, i32
  }
  func.func @transform_13(%arg0: i32) -> (i32, i32, i32) {
    %c0_i32 = arith.constant 0 : i32
    %c0_i32_0 = arith.constant 0 : i32
    %c0_i32_1 = arith.constant 0 : i32
    return %arg0, %c0_i32, %c0_i32_0 : i32, i32, i32
  }
}

</mosaic_0001>

<llo_original>
// kernel: tpu_custom_call.1
$region0: #{tpu_custom_call.1}
  #allocation0 [shape = 'u32[]', space=smem, size = 0x4, offset = 0x4, fixed_abs, tag = 'smem constant byte address 0x4 - core index']
  #allocation1 [shape = 'u32[72,128]{1,0:T(1,128)}', space=vmem, size = 0x9000, scoped, tag = 'internal scratch']
  %s0 = inlined_call_operand.hbm [shape: f32[128,128], index: 0, kind: input, shape index: {}]
  %s1 = inlined_call_operand.hbm [shape: f32[384,128], index: 1, kind: input, shape index: {}]
  %s2 = inlined_call_operand.vmem [shape: f32[1,128], index: 2, kind: input, shape index: {}]
  %s3 = inlined_call_operand.hbm [shape: f32[384,128], index: 3, kind: input, shape index: {}]
  %s4 = inlined_call_operand.vmem [shape: f32[1,128], index: 4, kind: input, shape index: {}]
  %s5 = inlined_call_operand.hbm [shape: f32[128,128], index: 5, kind: input, shape index: {}]
  %s6 = inlined_call_operand.vmem [shape: f32[1,128], index: 6, kind: input, shape index: {}]
  %s7 = inlined_call_operand.hbm [shape: f32[384,128], index: 7, kind: input, shape index: {}]
  %s8 = inlined_call_operand.vmem [shape: f32[1,128], index: 8, kind: input, shape index: {}]
  %s9 = inlined_call_operand.hbm [shape: f32[384,128], index: 9, kind: input, shape index: {}]
  %s10 = inlined_call_operand.vmem [shape: f32[1,128], index: 10, kind: input, shape index: {}]
  %s11 = inlined_call_operand.hbm [shape: f32[128,128], index: 11, kind: input, shape index: {}]
  %s12 = inlined_call_operand.vmem [shape: f32[1,128], index: 12, kind: input, shape index: {}]
  %s13 = inlined_call_operand.hbm [shape: f32[4,16,128], index: 13, kind: output, shape index: {}]
  %s14 = sld [smem:[#allocation0]]
  $region113: #{tpu_custom_call.1} parent=0
    _
  %s16 = ssub.s32 1, %s14
  %s17 = scalar_select 0, %s16, %s14
  $region1: #{tpu_custom_call.1} parent=0
    #allocation2 [shape = 'u8[32768]{0}', space=vmem, size = 0x8000, scoped, tag = 'input window, operand 0']
    #allocation3 [shape = 's32[2]{0}', space=sflag, size = 0x8, scoped, tag = 'scoped memory for tpu_custom_call.1']
    #allocation4 [shape = 's32[2]{0}', space=sflag, size = 0x8, scoped, tag = 'scoped memory for tpu_custom_call.1']
    #allocation5 [shape = 'u8[196608]{0}', space=vmem, size = 0x30000, scoped, tag = 'input window, operand 1, single buffered']
    #allocation6 [shape = 's32[1]{0}', space=sflag, size = 0x4, scoped, tag = 'scoped memory for tpu_custom_call.1']
    #allocation7 [shape = 'u8[196608]{0}', space=vmem, size = 0x30000, scoped, tag = 'input window, operand 3, single buffered']
    #allocation8 [shape = 'u8[65536]{0}', space=vmem, size = 0x10000, scoped, tag = 'input window, operand 5, single buffered']
    #allocation9 [shape = 's32[1]{0}', space=sflag, size = 0x4, scoped, tag = 'scoped memory for tpu_custom_call.1']
    #allocation10 [shape = 'u8[196608]{0}', space=vmem, size = 0x30000, scoped, tag = 'input window, operand 7, single buffered']
    #allocation11 [shape = 'u8[196608]{0}', space=vmem, size = 0x30000, scoped, tag = 'input window, operand 9, single buffered']
    #allocation12 [shape = 's32[1]{0}', space=sflag, size = 0x4, scoped, tag = 'scoped memory for tpu_custom_call.1']
    #allocation13 [shape = 'u8[65536]{0}', space=vmem, size = 0x10000, scoped, tag = 'input window, operand 11, single buffered']
    #allocation14 [shape = 'u8[16384]{0}', space=vmem, size = 0x4000, scoped, tag = 'output window, operand 0']
    %18 = vsyncpa [#allocation3], 0
    %s19 = scalar_lea.sflag [#allocation3], 1
    %20 = vsyncpa %s19, 0
    %21 = vsyncpa [#allocation6], 0
    %22 = vsyncpa [#allocation9], 0
    %23 = vsyncpa [#allocation12], 0
    %24 = vsyncpa [#allocation4], 0
    %s25 = scalar_lea.sflag [#allocation4], 1
    %26 = vsyncpa %s25, 0
    loop: start=0, step=1, limit=6
    $region2: #{tpu_custom_call.1} parent=1 // loop_pre_header
      _
    $region3: #{tpu_custom_call.1} parent=1 // loop_header
      %s28 = sphi 0, %s32
      %p29 = scmp.ge.s32.totalorder %s28, 6
      %s38 = sphi 0, %s40
      %s41 = sphi 0, %s38
      %s42 = sphi 0, %s41
      %s58 = sphi 0, %s42
      %s62 = sphi 0, %s62
      %s64 = sphi 0, %s62
      %s65 = sphi 0, %s64
      %s79 = sphi 0, %s65
      %s83 = sphi 0, %s83
      %s85 = sphi 0, %s83
      %s86 = sphi 0, %s85
      %s100 = sphi 0, %s86
      %s104 = sphi 0, %s104
      %s106 = sphi 0, %s104
      %s107 = sphi 0, %s106
      %s121 = sphi 0, %s107
      %s125 = sphi 0, %s125
      %s127 = sphi 0, %s125
      %s128 = sphi 0, %s127
      %s142 = sphi 0, %s128
      %s146 = sphi 0, %s146
      %s148 = sphi 0, %s146
      %s149 = sphi 0, %s148
      %s163 = sphi 0, %s149
      %s167 = sphi 0, %s167
      %s169 = sphi 0, %s167
      %s170 = sphi 0, %s169
      %s184 = sphi 0, %s170
      %s188 = sphi 0, %s188
      %s190 = sphi 0, %s188
      %s191 = sphi 0, %s190
      %s205 = sphi 0, %s191
      %s209 = sphi 0, %s209
      %s211 = sphi 0, %s209
      %s212 = sphi 0, %s211
      %s226 = sphi 0, %s212
      %s230 = sphi 0, %s230
      %s232 = sphi 0, %s230
      %s233 = sphi 0, %s232
      %s247 = sphi 0, %s233
      %s251 = sphi 0, %s251
      %s253 = sphi 0, %s251
      %s254 = sphi 0, %s253
      %s268 = sphi 0, %s254
      %s272 = sphi 0, %s272
      %s274 = sphi 0, %s272
      %s275 = sphi 0, %s274
      %s289 = sphi 0, %s275
      %s293 = sphi 0, %s293
      %s295 = sphi 0, %s293
      %s296 = sphi 0, %s295
      %s310 = sphi 0, %s296
      %s316 = sphi 0, %s318
      %s319 = sphi 0, %s316
      %s320 = sphi 0, %s319
      %s336 = sphi 0, %s320
    $region4: #{tpu_custom_call.1} parent=1 // loop_header_branch
      %31 = sbr.rel (%p29) target = $region8
    $region5: #{tpu_custom_call.1} parent=1 // loop_body
      %s33 = ssub.s32 %s28, 1
      %s34 = ssub.s32 %s28, 2
      %s35 = sadd.s32 %s28, 1
      %s36 = ssub.s32 %s28, %s35
      %p37 = scmp.eq.s32.totalorder %s36, 0
      %s39 = sadd.s32 %s38, 1
      %s40 = scalar_select %p37, %s38, %s39
      %p43 = pneg %p37
      %p44 = scmp.eq.s32.totalorder %s28, 3
      %p45 = por %p43, %p44
      %p46 = scmp.ne.s32.totalorder %s38, %s41
      %p47 = scmp.eq.s32.totalorder %s28, 0
      %p48 = por %p46, %p47
      %p49 = scmp.ne.s32.totalorder %s38, %s41
      %p50 = scmp.eq.s32.totalorder %s33, 3
      %p51 = por %p49, %p50
      %p52 = scmp.ne.s32.totalorder %s41, %s42
      %p53 = scmp.eq.s32.totalorder %s33, 0
      %p54 = por %p52, %p53
      %p55 = scmp.ne.s32.totalorder %s41, %s42
      %p56 = scmp.eq.s32.totalorder %s34, 3
      %p57 = por %p55, %p56
      %p59 = scmp.ne.s32.totalorder %s42, %s58
      %p60 = scmp.eq.s32.totalorder %s34, 0
      %p61 = por %p59, %p60
      %s63 = sadd.s32 %s62, 1
      %p66 = scmp.eq.s32.totalorder %s28, 3
      %p67 = scmp.ne.s32.totalorder %s62, %s64
      %p68 = scmp.eq.s32.totalorder %s28, 0
      %p69 = por %p67, %p68
      %p70 = scmp.ne.s32.totalorder %s62, %s64
      %p71 = scmp.eq.s32.totalorder %s33, 3
      %p72 = por %p70, %p71
      %p73 = scmp.ne.s32.totalorder %s64, %s65
      %p74 = scmp.eq.s32.totalorder %s33, 0
      %p75 = por %p73, %p74
      %p76 = scmp.ne.s32.totalorder %s64, %s65
      %p77 = scmp.eq.s32.totalorder %s34, 3
      %p78 = por %p76, %p77
      %p80 = scmp.ne.s32.totalorder %s65, %s79
      %p81 = scmp.eq.s32.totalorder %s34, 0
      %p82 = por %p80, %p81
      %s84 = sadd.s32 %s83, 1
      %p87 = scmp.eq.s32.totalorder %s28, 3
      %p88 = scmp.ne.s32.totalorder %s83, %s85
      %p89 = scmp.eq.s32.totalorder %s28, 0
      %p90 = por %p88, %p89
      %p91 = scmp.ne.s32.totalorder %s83, %s85
      %p92 = scmp.eq.s32.totalorder %s33, 3
      %p93 = por %p91, %p92
      %p94 = scmp.ne.s32.totalorder %s85, %s86
      %p95 = scmp.eq.s32.totalorder %s33, 0
      %p96 = por %p94, %p95
      %p97 = scmp.ne.s32.totalorder %s85, %s86
      %p98 = scmp.eq.s32.totalorder %s34, 3
      %p99 = por %p97, %p98
      %p101 = scmp.ne.s32.totalorder %s86, %s100
      %p102 = scmp.eq.s32.totalorder %s34, 0
      %p103 = por %p101, %p102
      %s105 = sadd.s32 %s104, 1
      %p108 = scmp.eq.s32.totalorder %s28, 3
      %p109 = scmp.ne.s32.totalorder %s104, %s106
      %p110 = scmp.eq.s32.totalorder %s28, 0
      %p111 = por %p109, %p110
      %p112 = scmp.ne.s32.totalorder %s104, %s106
      %p113 = scmp.eq.s32.totalorder %s33, 3
      %p114 = por %p112, %p113
      %p115 = scmp.ne.s32.totalorder %s106, %s107
      %p116 = scmp.eq.s32.totalorder %s33, 0
      %p117 = por %p115, %p116
      %p118 = scmp.ne.s32.totalorder %s106, %s107
      %p119 = scmp.eq.s32.totalorder %s34, 3
      %p120 = por %p118, %p119
      %p122 = scmp.ne.s32.totalorder %s107, %s121
      %p123 = scmp.eq.s32.totalorder %s34, 0
      %p124 = por %p122, %p123
      %s126 = sadd.s32 %s125, 1
      %p129 = scmp.eq.s32.totalorder %s28, 3
      %p130 = scmp.ne.s32.totalorder %s125, %s127
      %p131 = scmp.eq.s32.totalorder %s28, 0
      %p132 = por %p130, %p131
      %p133 = scmp.ne.s32.totalorder %s125, %s127
      %p134 = scmp.eq.s32.totalorder %s33, 3
      %p135 = por %p133, %p134
      %p136 = scmp.ne.s32.totalorder %s127, %s128
      %p137 = scmp.eq.s32.totalorder %s33, 0
      %p138 = por %p136, %p137
      %p139 = scmp.ne.s32.totalorder %s127, %s128
      %p140 = scmp.eq.s32.totalorder %s34, 3
      %p141 = por %p139, %p140
      %p143 = scmp.ne.s32.totalorder %s128, %s142
      %p144 = scmp.eq.s32.totalorder %s34, 0
      %p145 = por %p143, %p144
      %s147 = sadd.s32 %s146, 1
      %p150 = scmp.eq.s32.totalorder %s28, 3
      %p151 = scmp.ne.s32.totalorder %s146, %s148
      %p152 = scmp.eq.s32.totalorder %s28, 0
      %p153 = por %p151, %p152
      %p154 = scmp.ne.s32.totalorder %s146, %s148
      %p155 = scmp.eq.s32.totalorder %s33, 3
      %p156 = por %p154, %p155
      %p157 = scmp.ne.s32.totalorder %s148, %s149
      %p158 = scmp.eq.s32.totalorder %s33, 0
      %p159 = por %p157, %p158
      %p160 = scmp.ne.s32.totalorder %s148, %s149
      %p161 = scmp.eq.s32.totalorder %s34, 3
      %p162 = por %p160, %p161
      %p164 = scmp.ne.s32.totalorder %s149, %s163
      %p165 = scmp.eq.s32.totalorder %s34, 0
      %p166 = por %p164, %p165
      %s168 = sadd.s32 %s167, 1
      %p171 = scmp.eq.s32.totalorder %s28, 3
      %p172 = scmp.ne.s32.totalorder %s167, %s169
      %p173 = scmp.eq.s32.totalorder %s28, 0
      %p174 = por %p172, %p173
      %p175 = scmp.ne.s32.totalorder %s167, %s169
      %p176 = scmp.eq.s32.totalorder %s33, 3
      %p177 = por %p175, %p176
      %p178 = scmp.ne.s32.totalorder %s169, %s170
      %p179 = scmp.eq.s32.totalorder %s33, 0
      %p180 = por %p178, %p179
      %p181 = scmp.ne.s32.totalorder %s169, %s170
      %p182 = scmp.eq.s32.totalorder %s34, 3
      %p183 = por %p181, %p182
      %p185 = scmp.ne.s32.totalorder %s170, %s184
      %p186 = scmp.eq.s32.totalorder %s34, 0
      %p187 = por %p185, %p186
      %s189 = sadd.s32 %s188, 1
      %p192 = scmp.eq.s32.totalorder %s28, 3
      %p193 = scmp.ne.s32.totalorder %s188, %s190
      %p194 = scmp.eq.s32.totalorder %s28, 0
      %p195 = por %p193, %p194
      %p196 = scmp.ne.s32.totalorder %s188, %s190
      %p197 = scmp.eq.s32.totalorder %s33, 3
      %p198 = por %p196, %p197
      %p199 = scmp.ne.s32.totalorder %s190, %s191
      %p200 = scmp.eq.s32.totalorder %s33, 0
      %p201 = por %p199, %p200
      %p202 = scmp.ne.s32.totalorder %s190, %s191
      %p203 = scmp.eq.s32.totalorder %s34, 3
      %p204 = por %p202, %p203
      %p206 = scmp.ne.s32.totalorder %s191, %s205
      %p207 = scmp.eq.s32.totalorder %s34, 0
      %p208 = por %p206, %p207
      %s210 = sadd.s32 %s209, 1
      %p213 = scmp.eq.s32.totalorder %s28, 3
      %p214 = scmp.ne.s32.totalorder %s209, %s211
      %p215 = scmp.eq.s32.totalorder %s28, 0
      %p216 = por %p214, %p215
      %p217 = scmp.ne.s32.totalorder %s209, %s211
      %p218 = scmp.eq.s32.totalorder %s33, 3
      %p219 = por %p217, %p218
      %p220 = scmp.ne.s32.totalorder %s211, %s212
      %p221 = scmp.eq.s32.totalorder %s33, 0
      %p222 = por %p220, %p221
      %p223 = scmp.ne.s32.totalorder %s211, %s212
      %p224 = scmp.eq.s32.totalorder %s34, 3
      %p225 = por %p223, %p224
      %p227 = scmp.ne.s32.totalorder %s212, %s226
      %p228 = scmp.eq.s32.totalorder %s34, 0
      %p229 = por %p227, %p228
      %s231 = sadd.s32 %s230, 1
      %p234 = scmp.eq.s32.totalorder %s28, 3
      %p235 = scmp.ne.s32.totalorder %s230, %s232
      %p236 = scmp.eq.s32.totalorder %s28, 0
      %p237 = por %p235, %p236
      %p238 = scmp.ne.s32.totalorder %s230, %s232
      %p239 = scmp.eq.s32.totalorder %s33, 3
      %p240 = por %p238, %p239
      %p241 = scmp.ne.s32.totalorder %s232, %s233
      %p242 = scmp.eq.s32.totalorder %s33, 0
      %p243 = por %p241, %p242
      %p244 = scmp.ne.s32.totalorder %s232, %s233
      %p245 = scmp.eq.s32.totalorder %s34, 3
      %p246 = por %p244, %p245
      %p248 = scmp.ne.s32.totalorder %s233, %s247
      %p249 = scmp.eq.s32.totalorder %s34, 0
      %p250 = por %p248, %p249
      %s252 = sadd.s32 %s251, 1
      %p255 = scmp.eq.s32.totalorder %s28, 3
      %p256 = scmp.ne.s32.totalorder %s251, %s253
      %p257 = scmp.eq.s32.totalorder %s28, 0
      %p258 = por %p256, %p257
      %p259 = scmp.ne.s32.totalorder %s251, %s253
      %p260 = scmp.eq.s32.totalorder %s33, 3
      %p261 = por %p259, %p260
      %p262 = scmp.ne.s32.totalorder %s253, %s254
      %p263 = scmp.eq.s32.totalorder %s33, 0
      %p264 = por %p262, %p263
      %p265 = scmp.ne.s32.totalorder %s253, %s254
      %p266 = scmp.eq.s32.totalorder %s34, 3
      %p267 = por %p265, %p266
      %p269 = scmp.ne.s32.totalorder %s254, %s268
      %p270 = scmp.eq.s32.totalorder %s34, 0
      %p271 = por %p269, %p270
      %s273 = sadd.s32 %s272, 1
      %p276 = scmp.eq.s32.totalorder %s28, 3
      %p277 = scmp.ne.s32.totalorder %s272, %s274
      %p278 = scmp.eq.s32.totalorder %s28, 0
      %p279 = por %p277, %p278
      %p280 = scmp.ne.s32.totalorder %s272, %s274
      %p281 = scmp.eq.s32.totalorder %s33, 3
      %p282 = por %p280, %p281
      %p283 = scmp.ne.s32.totalorder %s274, %s275
      %p284 = scmp.eq.s32.totalorder %s33, 0
      %p285 = por %p283, %p284
      %p286 = scmp.ne.s32.totalorder %s274, %s275
      %p287 = scmp.eq.s32.totalorder %s34, 3
      %p288 = por %p286, %p287
      %p290 = scmp.ne.s32.totalorder %s275, %s289
      %p291 = scmp.eq.s32.totalorder %s34, 0
      %p292 = por %p290, %p291
      %s294 = sadd.s32 %s293, 1
      %p297 = scmp.eq.s32.totalorder %s28, 3
      %p298 = scmp.ne.s32.totalorder %s293, %s295
      %p299 = scmp.eq.s32.totalorder %s28, 0
      %p300 = por %p298, %p299
      %p301 = scmp.ne.s32.totalorder %s293, %s295
      %p302 = scmp.eq.s32.totalorder %s33, 3
      %p303 = por %p301, %p302
      %p304 = scmp.ne.s32.totalorder %s295, %s296
      %p305 = scmp.eq.s32.totalorder %s33, 0
      %p306 = por %p304, %p305
      %p307 = scmp.ne.s32.totalorder %s295, %s296
      %p308 = scmp.eq.s32.totalorder %s34, 3
      %p309 = por %p307, %p308
      %p311 = scmp.ne.s32.totalorder %s296, %s310
      %p312 = scmp.eq.s32.totalorder %s34, 0
      %p313 = por %p311, %p312
      %s314 = ssub.s32 %s28, %s35
      %p315 = scmp.eq.s32.totalorder %s314, 0
      %s317 = sadd.s32 %s316, 1
      %s318 = scalar_select %p315, %s316, %s317
      %p321 = pneg %p315
      %p322 = scmp.eq.s32.totalorder %s28, 3
      %p323 = por %p321, %p322
      %p324 = scmp.ne.s32.totalorder %s316, %s319
      %p325 = scmp.eq.s32.totalorder %s28, 0
      %p326 = por %p324, %p325
      %p327 = scmp.ne.s32.totalorder %s316, %s319
      %p328 = scmp.eq.s32.totalorder %s33, 3
      %p329 = por %p327, %p328
      %p330 = scmp.ne.s32.totalorder %s319, %s320
      %p331 = scmp.eq.s32.totalorder %s33, 0
      %p332 = por %p330, %p331
      %p333 = scmp.ne.s32.totalorder %s319, %s320
      %p334 = scmp.eq.s32.totalorder %s34, 3
      %p335 = por %p333, %p334
      %p337 = scmp.ne.s32.totalorder %s320, %s336
      %p338 = scmp.eq.s32.totalorder %s34, 0
      %p339 = por %p337, %p338
      %p340 = scmp.le.s32.totalorder 1, %s28
      %p341 = scmp.lt.s32.totalorder %s28, 5
      %p342 = pnand %p340, %p341
      %p343 = pneg %p342
      // Predicated region
      $region9: #{tpu_custom_call.1} parent=5 // pred_check
        _
      $region10: #{tpu_custom_call.1} parent=5 // pred_check_branch
        %345 = sbr.rel (%p342) target = $region12
      $region11: #{tpu_custom_call.1} parent=5 // pred_region
        %s346 = ssub.s32 %s28, 1
        // Predicated region
        $region13: #{tpu_custom_call.1} parent=11 // pred_check
          %p347 = pneg %p75
        $region14: #{tpu_custom_call.1} parent=11 // pred_check_branch
          %349 = sbr.rel (%p347) target = $region16
        $region15: #{tpu_custom_call.1} parent=11 // pred_region
          %351 = vsyncadd [#allocation6], 0
          %s352 = sshll.u32 %s1, 4
          %s353 = int_to_ptr.hbm [resolvable:$true] %s352
          %s354 = sshll.u32 [#allocation5], 4
          %s355 = int_to_ptr.vmem [resolvable:$true] %s354
          %360 = dma.hbm_to_vmem [thread:$0]  %s353, 6144, %s355, [#allocation6], 128, 128, 8
        $region16: #{tpu_custom_call.1} parent=11 // pred_fallthru
          _
        // Predicated region
        $region17: #{tpu_custom_call.1} parent=11 // pred_check
          %p361 = pneg %p96
        $region18: #{tpu_custom_call.1} parent=11 // pred_check_branch
          %363 = sbr.rel (%p361) target = $region20
        $region19: #{tpu_custom_call.1} parent=11 // pred_region
          _
        $region20: #{tpu_custom_call.1} parent=11 // pred_fallthru
          _
        // Predicated region
        $region21: #{tpu_custom_call.1} parent=11 // pred_check
          %p364 = pneg %p117
        $region22: #{tpu_custom_call.1} parent=11 // pred_check_branch
          %366 = sbr.rel (%p364) target = $region24
        $region23: #{tpu_custom_call.1} parent=11 // pred_region
          %368 = vsyncadd [#allocation6], 0
          %s369 = sshll.u32 %s3, 4
          %s370 = int_to_ptr.hbm [resolvable:$true] %s369
          %s371 = sshll.u32 [#allocation7], 4
          %s372 = int_to_ptr.vmem [resolvable:$true] %s371
          %377 = dma.hbm_to_vmem [thread:$0]  %s370, 6144, %s372, [#allocation6], 128, 128, 8
        $region24: #{tpu_custom_call.1} parent=11 // pred_fallthru
          _
        // Predicated region
        $region25: #{tpu_custom_call.1} parent=11 // pred_check
          %p378 = pneg %p138
        $region26: #{tpu_custom_call.1} parent=11 // pred_check_branch
          %380 = sbr.rel (%p378) target = $region28
        $region27: #{tpu_custom_call.1} parent=11 // pred_region
          _
        $region28: #{tpu_custom_call.1} parent=11 // pred_fallthru
          _
        // Predicated region
        $region29: #{tpu_custom_call.1} parent=11 // pred_check
          %p381 = pneg %p159
        $region30: #{tpu_custom_call.1} parent=11 // pred_check_branch
          %383 = sbr.rel (%p381) target = $region32
        $region31: #{tpu_custom_call.1} parent=11 // pred_region
          %385 = vsyncadd [#allocation9], 0
          %s386 = sshll.u32 %s5, 4
          %s387 = int_to_ptr.hbm [resolvable:$true] %s386
          %s388 = sshll.u32 [#allocation8], 4
          %s389 = int_to_ptr.vmem [resolvable:$true] %s388
          %394 = dma.hbm_to_vmem [thread:$0]  %s387, 2048, %s389, [#allocation9], 128, 128, 8
        $region32: #{tpu_custom_call.1} parent=11 // pred_fallthru
          _
        // Predicated region
        $region33: #{tpu_custom_call.1} parent=11 // pred_check
          %p395 = pneg %p180
        $region34: #{tpu_custom_call.1} parent=11 // pred_check_branch
          %397 = sbr.rel (%p395) target = $region36
        $region35: #{tpu_custom_call.1} parent=11 // pred_region
          _
        $region36: #{tpu_custom_call.1} parent=11 // pred_fallthru
          _
        // Predicated region
        $region37: #{tpu_custom_call.1} parent=11 // pred_check
          %p398 = pneg %p201
        $region38: #{tpu_custom_call.1} parent=11 // pred_check_branch
          %400 = sbr.rel (%p398) target = $region40
        $region39: #{tpu_custom_call.1} parent=11 // pred_region
          %402 = vsyncadd [#allocation9], 0
          %s403 = sshll.u32 %s7, 4
          %s404 = int_to_ptr.hbm [resolvable:$true] %s403
          %s405 = sshll.u32 [#allocation10], 4
          %s406 = int_to_ptr.vmem [resolvable:$true] %s405
          %411 = dma.hbm_to_vmem [thread:$0]  %s404, 6144, %s406, [#allocation9], 128, 128, 8
        $region40: #{tpu_custom_call.1} parent=11 // pred_fallthru
          _
        // Predicated region
        $region41: #{tpu_custom_call.1} parent=11 // pred_check
          %p412 = pneg %p222
        $region42: #{tpu_custom_call.1} parent=11 // pred_check_branch
          %414 = sbr.rel (%p412) target = $region44
        $region43: #{tpu_custom_call.1} parent=11 // pred_region
          _
        $region44: #{tpu_custom_call.1} parent=11 // pred_fallthru
          _
        // Predicated region
        $region45: #{tpu_custom_call.1} parent=11 // pred_check
          %p415 = pneg %p243
        $region46: #{tpu_custom_call.1} parent=11 // pred_check_branch
          %417 = sbr.rel (%p415) target = $region48
        $region47: #{tpu_custom_call.1} parent=11 // pred_region
          %419 = vsyncadd [#allocation12], 0
          %s420 = sshll.u32 %s9, 4
          %s421 = int_to_ptr.hbm [resolvable:$true] %s420
          %s422 = sshll.u32 [#allocation11], 4
          %s423 = int_to_ptr.vmem [resolvable:$true] %s422
          %428 = dma.hbm_to_vmem [thread:$0]  %s421, 6144, %s423, [#allocation12], 128, 128, 8
        $region48: #{tpu_custom_call.1} parent=11 // pred_fallthru
          _
        // Predicated region
        $region49: #{tpu_custom_call.1} parent=11 // pred_check
          %p429 = pneg %p264
        $region50: #{tpu_custom_call.1} parent=11 // pred_check_branch
          %431 = sbr.rel (%p429) target = $region52
        $region51: #{tpu_custom_call.1} parent=11 // pred_region
          _
        $region52: #{tpu_custom_call.1} parent=11 // pred_fallthru
          _
        // Predicated region
        $region53: #{tpu_custom_call.1} parent=11 // pred_check
          %p432 = pneg %p285
        $region54: #{tpu_custom_call.1} parent=11 // pred_check_branch
          %434 = sbr.rel (%p432) target = $region56
        $region55: #{tpu_custom_call.1} parent=11 // pred_region
          %436 = vsyncadd [#allocation12], 0
          %s437 = sshll.u32 %s11, 4
          %s438 = int_to_ptr.hbm [resolvable:$true] %s437
          %s439 = sshll.u32 [#allocation13], 4
          %s440 = int_to_ptr.vmem [resolvable:$true] %s439
          %445 = dma.hbm_to_vmem [thread:$0]  %s438, 2048, %s440, [#allocation12], 128, 128, 8
        $region56: #{tpu_custom_call.1} parent=11 // pred_fallthru
          _
        // Predicated region
        $region57: #{tpu_custom_call.1} parent=11 // pred_check
          %p446 = pneg %p306
        $region58: #{tpu_custom_call.1} parent=11 // pred_check_branch
          %448 = sbr.rel (%p446) target = $region60
        $region59: #{tpu_custom_call.1} parent=11 // pred_region
          _
        $region60: #{tpu_custom_call.1} parent=11 // pred_fallthru
          _
      $region12: #{tpu_custom_call.1} parent=5 // pred_fallthru
        _
      %p449 = scmp.lt.s32.totalorder %s28, 4
      // Predicated region
      $region61: #{tpu_custom_call.1} parent=5 // pred_check
        %p450 = pneg %p449
      $region62: #{tpu_custom_call.1} parent=5 // pred_check_branch
        %452 = sbr.rel (%p450) target = $region64
      $region63: #{tpu_custom_call.1} parent=5 // pred_region
        // Predicated region
        $region65: #{tpu_custom_call.1} parent=63 // pred_check
          %p453 = pneg %p48
        $region66: #{tpu_custom_call.1} parent=63 // pred_check_branch
          %455 = sbr.rel (%p453) target = $region68
        $region67: #{tpu_custom_call.1} parent=63 // pred_region
          %s456 = sand.u32 %s38, 1
          %s457 = scalar_lea.sflag [#allocation3], %s456
          %s458 = sand.u32 %s38, 1
          %s459 = smul.addr %s458, 32
          %s460 = scalar_lea.vmem [#allocation2], %s459
          %s461 = smul.u32 4, %s28
          %463 = vsyncadd %s457, 0
          %s464 = smul.addr %s461, 8
          %s465 = scalar_lea.hbm %s0, %s464
          %s466 = sshll.u32 %s465, 4
          %s467 = int_to_ptr.hbm [resolvable:$true] %s466
          %s468 = sshll.u32 %s460, 4
          %s469 = int_to_ptr.vmem [resolvable:$true] %s468
          %474 = dma.hbm_to_vmem [thread:$0]  %s467, 512, %s469, %s457, 128, 128, 8
        $region68: #{tpu_custom_call.1} parent=63 // pred_fallthru
          _
      $region64: #{tpu_custom_call.1} parent=5 // pred_fallthru
        _
      %p475 = scmp.le.s32.totalorder 1, %s28
      %p476 = scmp.lt.s32.totalorder %s28, 5
      %p477 = pnand %p475, %p476
      %p478 = pneg %p477
      // Predicated region
      $region69: #{tpu_custom_call.1} parent=5 // pred_check
        _
      $region70: #{tpu_custom_call.1} parent=5 // pred_check_branch
        %480 = sbr.rel (%p477) target = $region72
      $region71: #{tpu_custom_call.1} parent=5 // pred_region
        %s481 = ssub.s32 %s28, 1
        %s482 = sand.u32 %s41, 1
        %s483 = scalar_lea.sflag [#allocation3], %s482
        %s484 = sand.u32 %s41, 1
        %s485 = smul.addr %s484, 32
        %s486 = scalar_lea.vmem [#allocation2], %s485
        // Predicated region
        $region73: #{tpu_custom_call.1} parent=71 // pred_check
          %p487 = pneg %p54
        $region74: #{tpu_custom_call.1} parent=71 // pred_check_branch
          %489 = sbr.rel (%p487) target = $region76
        $region75: #{tpu_custom_call.1} parent=71 // pred_region
          %491 = dma.done %s483, 512
        $region76: #{tpu_custom_call.1} parent=71 // pred_fallthru
          _
        // Predicated region
        $region77: #{tpu_custom_call.1} parent=71 // pred_check
          %p492 = pneg %p75
        $region78: #{tpu_custom_call.1} parent=71 // pred_check_branch
          %494 = sbr.rel (%p492) target = $region80
        $region79: #{tpu_custom_call.1} parent=71 // pred_region
          %496 = dma.done [#allocation6], 6144
        $region80: #{tpu_custom_call.1} parent=71 // pred_fallthru
          _
        // Predicated region
        $region81: #{tpu_custom_call.1} parent=71 // pred_check
          %p497 = pneg %p117
        $region82: #{tpu_custom_call.1} parent=71 // pred_check_branch
          %499 = sbr.rel (%p497) target = $region84
        $region83: #{tpu_custom_call.1} parent=71 // pred_region
          %501 = dma.done [#allocation6], 6144
        $region84: #{tpu_custom_call.1} parent=71 // pred_fallthru
          _
        // Predicated region
        $region85: #{tpu_custom_call.1} parent=71 // pred_check
          %p502 = pneg %p159
        $region86: #{tpu_custom_call.1} parent=71 // pred_check_branch
          %504 = sbr.rel (%p502) target = $region88
        $region87: #{tpu_custom_call.1} parent=71 // pred_region
          %506 = dma.done [#allocation9], 2048
        $region88: #{tpu_custom_call.1} parent=71 // pred_fallthru
          _
        // Predicated region
        $region89: #{tpu_custom_call.1} parent=71 // pred_check
          %p507 = pneg %p201
        $region90: #{tpu_custom_call.1} parent=71 // pred_check_branch
          %509 = sbr.rel (%p507) target = $region92
        $region91: #{tpu_custom_call.1} parent=71 // pred_region
          %511 = dma.done [#allocation9], 6144
        $region92: #{tpu_custom_call.1} parent=71 // pred_fallthru
          _
        // Predicated region
        $region93: #{tpu_custom_call.1} parent=71 // pred_check
          %p512 = pneg %p243
        $region94: #{tpu_custom_call.1} parent=71 // pred_check_branch
          %514 = sbr.rel (%p512) target = $region96
        $region95: #{tpu_custom_call.1} parent=71 // pred_region
          %516 = dma.done [#allocation12], 6144
        $region96: #{tpu_custom_call.1} parent=71 // pred_fallthru
          _
        // Predicated region
        $region97: #{tpu_custom_call.1} parent=71 // pred_check
          %p517 = pneg %p285
        $region98: #{tpu_custom_call.1} parent=71 // pred_check_branch
          %519 = sbr.rel (%p517) target = $region100
        $region99: #{tpu_custom_call.1} parent=71 // pred_region
          %521 = dma.done [#allocation12], 2048
        $region100: #{tpu_custom_call.1} parent=71 // pred_fallthru
          _
        %s522 = sand.u32 %s41, 1
        %s523 = scalar_lea.sflag [#allocation3], %s522
        %s524 = sand.u32 %s41, 1
        %s525 = smul.addr %s524, 32
        %s526 = scalar_lea.vmem [#allocation2], %s525
        %p527 = pneg %p54
        %p528 = pneg %p51
        %p529 = pneg %p75
        %p530 = pneg %p72
        %p531 = pneg %p96
        %p532 = pneg %p93
        %p533 = pneg %p117
        %p534 = pneg %p114
        %p535 = pneg %p138
        %p536 = pneg %p135
        %p537 = pneg %p159
        %p538 = pneg %p156
        %p539 = pneg %p180
        %p540 = pneg %p177
        %p541 = pneg %p201
        %p542 = pneg %p198
        %p543 = pneg %p222
        %p544 = pneg %p219
        %p545 = pneg %p243
        %p546 = pneg %p240
        %p547 = pneg %p264
        %p548 = pneg %p261
        %p549 = pneg %p285
        %p550 = pneg %p282
        %p551 = pneg %p306
        %p552 = pneg %p303
        %p553 = pneg %p332
        %p554 = pneg %p329
        %s555 = sand.u32 %s319, 1
        %s556 = scalar_lea.sflag [#allocation4], %s555
        %s557 = sand.u32 %s319, 1
        %s558 = smul.addr %s557, 16
        %s559 = scalar_lea.vmem [#allocation14], %s558
        %s560 = smul.u32 4, %s33
        %v561 = vlaneseq
        %v562 = vshrl.u32 %v561, 7
        %v563 = vadd.s32 %v562, 8
        %v564 = vadd.s32 %v562, 16
        %v565 = vadd.s32 %v562, 24
        %vm566 = vcmp.lt.s32.totalorder %v562, 0
        %v567 = vsub.s32 0, %v562
        %v568 = vsel %vm566, %v567, %v562
        %v569 = vshrl.u32 %v568, 5
        %v570 = vand.u32 %v568, 31
        %v571 = vsub.s32 0, %v570
        %v572 = vsel %vm566, %v571, %v570
        %vm573 = vcmp.lt.s32.totalorder %v563, 0
        %v574 = vsub.s32 0, %v563
        %v575 = vsel %vm573, %v574, %v563
        %v576 = vshrl.u32 %v575, 5
        %v577 = vand.u32 %v575, 31
        %v578 = vsub.s32 0, %v577
        %v579 = vsel %vm573, %v578, %v577
        %vm580 = vcmp.lt.s32.totalorder %v564, 0
        %v581 = vsub.s32 0, %v564
        %v582 = vsel %vm580, %v581, %v564
        %v583 = vshrl.u32 %v582, 5
        %v584 = vand.u32 %v582, 31
        %v585 = vsub.s32 0, %v584
        %v586 = vsel %vm580, %v585, %v584
        %vm587 = vcmp.lt.s32.totalorder %v565, 0
        %v588 = vsub.s32 0, %v565
        %v589 = vsel %vm587, %v588, %v565
        %v590 = vshrl.u32 %v589, 5
        %v591 = vand.u32 %v589, 31
        %v592 = vsub.s32 0, %v591
        %v593 = vsel %vm587, %v592, %v591
        %vm594 = vcmp.ne.s32.totalorder %v572, 0
        %vm595 = vcmp.ne.s32.totalorder %v579, 0
        %vm596 = vcmp.ne.s32.totalorder %v586, 0
        %vm597 = vcmp.ne.s32.totalorder %v593, 0
        %vm598 = vcmp.lt.s32.totalorder %v572, 0
        %vm599 = vcmp.lt.s32.totalorder %v579, 0
        %vm600 = vcmp.lt.s32.totalorder %v586, 0
        %vm601 = vcmp.lt.s32.totalorder %v593, 0
        %vm602 = vmand %vm598, %vm594
        %vm603 = vmand %vm599, %vm595
        %vm604 = vmand %vm600, %vm596
        %vm605 = vmand %vm601, %vm597
        %v606 = vadd.s32 %v572, 32
        %v607 = vadd.s32 %v579, 32
        %v608 = vadd.s32 %v586, 32
        %v609 = vadd.s32 %v593, 32
        %v610 = vsel %vm602, %v606, %v572
        %v611 = vsel %vm603, %v607, %v579
        %v612 = vsel %vm604, %v608, %v586
        %v613 = vsel %vm605, %v609, %v593
        %vm614 = vcmp.ge.s32.totalorder %v610, 12
        %vm615 = vcmp.ge.s32.totalorder %v611, 12
        %vm616 = vcmp.ge.s32.totalorder %v612, 12
        %vm617 = vcmp.ge.s32.totalorder %v613, 12
        %v618 = vld [vmem:[%s486] sm:$0xff]
        %v619 = vld [vmem:[%s486 + $0x8] sm:$0xff]
        %v620 = vld [vmem:[%s486 + $0x10] sm:$0xff]
        %v621 = vld [vmem:[%s486 + $0x18] sm:$0xff]
        %vm626 = vcmask 1046528
        %v627 = vrot.slane %v618, 1
        %v628 = vrot.slane %v619, 1
        %v629 = vsel %vm626, %v627, %v628
        %v630 = vrot.slane %v620, 1
        %v631 = vsel %vm626, %v628, %v630
        %v632 = vrot.slane %v621, 1
        %v633 = vsel %vm626, %v630, %v632
        %vm638 = vcmask 1045504
        %v639 = vrot.slane %v618, 2
        %v640 = vrot.slane %v619, 2
        %v641 = vsel %vm638, %v639, %v640
        %v642 = vrot.slane %v620, 2
        %v643 = vsel %vm638, %v640, %v642
        %v644 = vrot.slane %v621, 2
        %v645 = vsel %vm638, %v642, %v644
        %v650 = vld [vmem:[#allocation5] sm:$0xff]
        %v651 = vld [vmem:[#allocation5 + $0x8] sm:$0xff]
        %v652 = vld [vmem:[#allocation5 + $0x10] sm:$0xff]
        %v653 = vld [vmem:[#allocation5 + $0x18] sm:$0xff]
        %v654 = vld [vmem:[#allocation5 + $0x20] sm:$0xff]
        %v655 = vld [vmem:[#allocation5 + $0x28] sm:$0xff]
        %v656 = vld [vmem:[#allocation5 + $0x30] sm:$0xff]
        %v657 = vld [vmem:[#allocation5 + $0x38] sm:$0xff]
        %v658 = vld [vmem:[#allocation5 + $0x40] sm:$0xff]
        %v659 = vld [vmem:[#allocation5 + $0x48] sm:$0xff]
        %v660 = vld [vmem:[#allocation5 + $0x50] sm:$0xff]
        %v661 = vld [vmem:[#allocation5 + $0x58] sm:$0xff]
        %v662 = vld [vmem:[#allocation5 + $0x60] sm:$0xff]
        %v663 = vld [vmem:[#allocation5 + $0x68] sm:$0xff]
        %v664 = vld [vmem:[#allocation5 + $0x70] sm:$0xff]
        %v665 = vld [vmem:[#allocation5 + $0x78] sm:$0xff]
        %v666 = vld [vmem:[#allocation5 + $0x80] sm:$0xff]
        %v667 = vld [vmem:[#allocation5 + $0x88] sm:$0xff]
        %v668 = vld [vmem:[#allocation5 + $0x90] sm:$0xff]
        %v669 = vld [vmem:[#allocation5 + $0x98] sm:$0xff]
        %v670 = vld [vmem:[#allocation5 + $0xa0] sm:$0xff]
        %v671 = vld [vmem:[#allocation5 + $0xa8] sm:$0xff]
        %v672 = vld [vmem:[#allocation5 + $0xb0] sm:$0xff]
        %v673 = vld [vmem:[#allocation5 + $0xb8] sm:$0xff]
        %v674 = vld [vmem:[#allocation5 + $0xc0] sm:$0xff]
        %v675 = vld [vmem:[#allocation5 + $0xc8] sm:$0xff]
        %v676 = vld [vmem:[#allocation5 + $0xd0] sm:$0xff]
        %v677 = vld [vmem:[#allocation5 + $0xd8] sm:$0xff]
        %v678 = vld [vmem:[#allocation5 + $0xe0] sm:$0xff]
        %v679 = vld [vmem:[#allocation5 + $0xe8] sm:$0xff]
        %v680 = vld [vmem:[#allocation5 + $0xf0] sm:$0xff]
        %v681 = vld [vmem:[#allocation5 + $0xf8] sm:$0xff]
        %v682 = vld [vmem:[#allocation5 + $0x100] sm:$0xff]
        %v683 = vld [vmem:[#allocation5 + $0x108] sm:$0xff]
        %v684 = vld [vmem:[#allocation5 + $0x110] sm:$0xff]
        %v685 = vld [vmem:[#allocation5 + $0x118] sm:$0xff]
        %v686 = vld [vmem:[#allocation5 + $0x120] sm:$0xff]
        %v687 = vld [vmem:[#allocation5 + $0x128] sm:$0xff]
        %v688 = vld [vmem:[#allocation5 + $0x130] sm:$0xff]
        %v689 = vld [vmem:[#allocation5 + $0x138] sm:$0xff]
        %v690 = vld [vmem:[#allocation5 + $0x140] sm:$0xff]
        %v691 = vld [vmem:[#allocation5 + $0x148] sm:$0xff]
        %v692 = vld [vmem:[#allocation5 + $0x150] sm:$0xff]
        %v693 = vld [vmem:[#allocation5 + $0x158] sm:$0xff]
        %v694 = vld [vmem:[#allocation5 + $0x160] sm:$0xff]
        %v695 = vld [vmem:[#allocation5 + $0x168] sm:$0xff]
        %v696 = vld [vmem:[#allocation5 + $0x170] sm:$0xff]
        %v697 = vld [vmem:[#allocation5 + $0x178] sm:$0xff]
        %v698 = vld [vmem:[%s2] sm:$0x1]
        %v700 = vperm.slane %v698, 0
        %702 = vmatpush.msra.mxu0 %v665
        %703 = vmatpush.msra.mxu0 %v664
        %704 = vmatpush.msra.mxu0 %v663
        %705 = vmatpush.msra.mxu0 %v662
        %706 = vmatpush.msra.mxu0 %v661
        %707 = vmatpush.msra.mxu0 %v660
        %708 = vmatpush.msra.mxu0 %v659
        %709 = vmatpush.msra.mxu0 %v658
        %710 = vmatpush.msra.mxu0 %v657
        %711 = vmatpush.msra.mxu0 %v656
        %712 = vmatpush.msra.mxu0 %v655
        %713 = vmatpush.msra.mxu0 %v654
        %714 = vmatpush.msra.mxu0 %v653
        %715 = vmatpush.msra.mxu0 %v652
        %716 = vmatpush.msra.mxu0 %v651
        %717 = vmatpush.msra.mxu0 %v650
        %718 = vmatmul.f32.gmra.mxu0 %v618
        %v719 = vpop.f32.mrf.mxu0
        %v720 = vadd.f32 %v700, %v719
        %721 = vmatmul.f32.gmra.mxu0 %v619
        %v722 = vpop.f32.mrf.mxu0
        %v723 = vadd.f32 %v700, %v722
        %724 = vmatmul.f32.gmra.mxu0 %v620
        %v725 = vpop.f32.mrf.mxu0
        %v726 = vadd.f32 %v700, %v725
        %727 = vmatmul.f32.gmra.mxu0 %v621
        %v728 = vpop.f32.mrf.mxu0
        %v729 = vadd.f32 %v700, %v728
        %730 = vdwg.mxu0
        %731 = vmatpush.msra.mxu0 %v681
        %732 = vmatpush.msra.mxu0 %v680
        %733 = vmatpush.msra.mxu0 %v679
        %734 = vmatpush.msra.mxu0 %v678
        %735 = vmatpush.msra.mxu0 %v677
        %736 = vmatpush.msra.mxu0 %v676
        %737 = vmatpush.msra.mxu0 %v675
        %738 = vmatpush.msra.mxu0 %v674
        %739 = vmatpush.msra.mxu0 %v673
        %740 = vmatpush.msra.mxu0 %v672
        %741 = vmatpush.msra.mxu0 %v671
        %742 = vmatpush.msra.mxu0 %v670
        %743 = vmatpush.msra.mxu0 %v669
        %744 = vmatpush.msra.mxu0 %v668
        %745 = vmatpush.msra.mxu0 %v667
        %746 = vmatpush.msra.mxu0 %v666
        %747 = vmatmul.f32.gmra.mxu0 %v629
        %v748 = vpop.f32.mrf.mxu0
        %v749 = vadd.f32 %v720, %v748
        %750 = vmatmul.f32.gmra.mxu0 %v631
        %v751 = vpop.f32.mrf.mxu0
        %v752 = vadd.f32 %v723, %v751
        %753 = vmatmul.f32.gmra.mxu0 %v633
        %v754 = vpop.f32.mrf.mxu0
        %v755 = vadd.f32 %v726, %v754
        %756 = vmatmul.f32.gmra.mxu0 %v632
        %v757 = vpop.f32.mrf.mxu0
        %v758 = vadd.f32 %v729, %v757
        %759 = vdwg.mxu0
        %760 = vmatpush.msra.mxu0 %v697
        %761 = vmatpush.msra.mxu0 %v696
        %762 = vmatpush.msra.mxu0 %v695
        %763 = vmatpush.msra.mxu0 %v694
        %764 = vmatpush.msra.mxu0 %v693
        %765 = vmatpush.msra.mxu0 %v692
        %766 = vmatpush.msra.mxu0 %v691
        %767 = vmatpush.msra.mxu0 %v690
        %768 = vmatpush.msra.mxu0 %v689
        %769 = vmatpush.msra.mxu0 %v688
        %770 = vmatpush.msra.mxu0 %v687
        %771 = vmatpush.msra.mxu0 %v686
        %772 = vmatpush.msra.mxu0 %v685
        %773 = vmatpush.msra.mxu0 %v684
        %774 = vmatpush.msra.mxu0 %v683
        %775 = vmatpush.msra.mxu0 %v682
        %776 = vmatmul.f32.gmra.mxu0 %v641
        %v777 = vpop.f32.mrf.mxu0
        %v778 = vadd.f32 %v749, %v777
        %779 = vmatmul.f32.gmra.mxu0 %v643
        %v780 = vpop.f32.mrf.mxu0
        %v781 = vadd.f32 %v752, %v780
        %782 = vmatmul.f32.gmra.mxu0 %v645
        %v783 = vpop.f32.mrf.mxu0
        %v784 = vadd.f32 %v755, %v783
        %785 = vmatmul.f32.gmra.mxu0 %v644
        %v786 = vpop.f32.mrf.mxu0
        %v787 = vadd.f32 %v758, %v786
        %788 = vdwg.mxu0
        %v789 = vmax.f32 %v778, 0.0
        %v790 = vmax.f32 %v781, 0.0
        %v791 = vmax.f32 %v784, 0.0
        %v792 = vmax.f32 %v787, 0.0
        %v793 = vsel %vm614, 1, 0
        %v794 = vsel %vm615, 1, 0
        %v795 = vsel %vm616, 1, 0
        %v796 = vsel %vm617, 1, 0
        %vm797 = vcmp.eq.s32.totalorder %v793, 1
        %vm798 = vcmp.eq.s32.totalorder %v794, 1
        %vm799 = vcmp.eq.s32.totalorder %v795, 1
        %vm800 = vcmp.eq.s32.totalorder %v796, 1
        %vm805 = vcmask 1041408
        %v806 = vrot.slane %v789, 6
        %v807 = vrot.slane %v790, 6
        %v808 = vsel %vm805, %v806, %v807
        %v809 = vrot.slane %v791, 6
        %v810 = vsel %vm805, %v807, %v809
        %v811 = vrot.slane %v792, 6
        %v812 = vsel %vm805, %v809, %v811
        %v817 = vsel %vm797, %v806, 0.0
        %v818 = vsel %vm798, %v808, 0.0
        %v819 = vsel %vm799, %v810, 0.0
        %v820 = vsel %vm800, %v812, 0.0
        %v825 = vrot.slane %v817, 1
        %v826 = vrot.slane %v818, 1
        %v827 = vsel %vm626, %v825, %v826
        %v828 = vrot.slane %v819, 1
        %v829 = vsel %vm626, %v826, %v828
        %v830 = vrot.slane %v820, 1
        %v831 = vsel %vm626, %v828, %v830
        %v832 = vrot.slane %v817, 2
        %v833 = vrot.slane %v818, 2
        %v834 = vsel %vm638, %v832, %v833
        %v835 = vrot.slane %v819, 2
        %v836 = vsel %vm638, %v833, %v835
        %v837 = vrot.slane %v820, 2
        %v838 = vsel %vm638, %v835, %v837
        %v839 = vld [vmem:[#allocation7] sm:$0xff]
        %v840 = vld [vmem:[#allocation7 + $0x8] sm:$0xff]
        %v841 = vld [vmem:[#allocation7 + $0x10] sm:$0xff]
        %v842 = vld [vmem:[#allocation7 + $0x18] sm:$0xff]
        %v843 = vld [vmem:[#allocation7 + $0x20] sm:$0xff]
        %v844 = vld [vmem:[#allocation7 + $0x28] sm:$0xff]
        %v845 = vld [vmem:[#allocation7 + $0x30] sm:$0xff]
        %v846 = vld [vmem:[#allocation7 + $0x38] sm:$0xff]
        %v847 = vld [vmem:[#allocation7 + $0x40] sm:$0xff]
        %v848 = vld [vmem:[#allocation7 + $0x48] sm:$0xff]
        %v849 = vld [vmem:[#allocation7 + $0x50] sm:$0xff]
        %v850 = vld [vmem:[#allocation7 + $0x58] sm:$0xff]
        %v851 = vld [vmem:[#allocation7 + $0x60] sm:$0xff]
        %v852 = vld [vmem:[#allocation7 + $0x68] sm:$0xff]
        %v853 = vld [vmem:[#allocation7 + $0x70] sm:$0xff]
        %v854 = vld [vmem:[#allocation7 + $0x78] sm:$0xff]
        %v855 = vld [vmem:[#allocation7 + $0x80] sm:$0xff]
        %v856 = vld [vmem:[#allocation7 + $0x88] sm:$0xff]
        %v857 = vld [vmem:[#allocation7 + $0x90] sm:$0xff]
        %v858 = vld [vmem:[#allocation7 + $0x98] sm:$0xff]
        %v859 = vld [vmem:[#allocation7 + $0xa0] sm:$0xff]
        %v860 = vld [vmem:[#allocation7 + $0xa8] sm:$0xff]
        %v861 = vld [vmem:[#allocation7 + $0xb0] sm:$0xff]
        %v862 = vld [vmem:[#allocation7 + $0xb8] sm:$0xff]
        %v863 = vld [vmem:[#allocation7 + $0xc0] sm:$0xff]
        %v864 = vld [vmem:[#allocation7 + $0xc8] sm:$0xff]
        %v865 = vld [vmem:[#allocation7 + $0xd0] sm:$0xff]
        %v866 = vld [vmem:[#allocation7 + $0xd8] sm:$0xff]
        %v867 = vld [vmem:[#allocation7 + $0xe0] sm:$0xff]
        %v868 = vld [vmem:[#allocation7 + $0xe8] sm:$0xff]
        %v869 = vld [vmem:[#allocation7 + $0xf0] sm:$0xff]
        %v870 = vld [vmem:[#allocation7 + $0xf8] sm:$0xff]
        %v871 = vld [vmem:[#allocation7 + $0x100] sm:$0xff]
        %v872 = vld [vmem:[#allocation7 + $0x108] sm:$0xff]
        %v873 = vld [vmem:[#allocation7 + $0x110] sm:$0xff]
        %v874 = vld [vmem:[#allocation7 + $0x118] sm:$0xff]
        %v875 = vld [vmem:[#allocation7 + $0x120] sm:$0xff]
        %v876 = vld [vmem:[#allocation7 + $0x128] sm:$0xff]
        %v877 = vld [vmem:[#allocation7 + $0x130] sm:$0xff]
        %v878 = vld [vmem:[#allocation7 + $0x138] sm:$0xff]
        %v879 = vld [vmem:[#allocation7 + $0x140] sm:$0xff]
        %v880 = vld [vmem:[#allocation7 + $0x148] sm:$0xff]
        %v881 = vld [vmem:[#allocation7 + $0x150] sm:$0xff]
        %v882 = vld [vmem:[#allocation7 + $0x158] sm:$0xff]
        %v883 = vld [vmem:[#allocation7 + $0x160] sm:$0xff]
        %v884 = vld [vmem:[#allocation7 + $0x168] sm:$0xff]
        %v885 = vld [vmem:[#allocation7 + $0x170] sm:$0xff]
        %v886 = vld [vmem:[#allocation7 + $0x178] sm:$0xff]
        %v887 = vld [vmem:[%s4] sm:$0x1]
        %v889 = vperm.slane %v887, 0
        %v891 = vrot.slane %v827, 2
        %v892 = vrot.slane %v829, 2
        %v893 = vsel %vm638, %v891, %v892
        %v894 = vrot.slane %v834, 2
        %v895 = vrot.slane %v836, 2
        %v896 = vsel %vm638, %v894, %v895
        %v897 = vrot.slane %v831, 2
        %v898 = vsel %vm638, %v892, %v897
        %v899 = vrot.slane %v838, 2
        %v900 = vsel %vm638, %v895, %v899
        %v901 = vrot.slane %v830, 2
        %v902 = vsel %vm638, %v897, %v901
        %v903 = vrot.slane %v837, 2
        %v904 = vsel %vm638, %v899, %v903
        %917 = vmatpush.msra.mxu0 %v854
        %918 = vmatpush.msra.mxu0 %v853
        %919 = vmatpush.msra.mxu0 %v852
        %920 = vmatpush.msra.mxu0 %v851
        %921 = vmatpush.msra.mxu0 %v850
        %922 = vmatpush.msra.mxu0 %v849
        %923 = vmatpush.msra.mxu0 %v848
        %924 = vmatpush.msra.mxu0 %v847
        %925 = vmatpush.msra.mxu0 %v846
        %926 = vmatpush.msra.mxu0 %v845
        %927 = vmatpush.msra.mxu0 %v844
        %928 = vmatpush.msra.mxu0 %v843
        %929 = vmatpush.msra.mxu0 %v842
        %930 = vmatpush.msra.mxu0 %v841
        %931 = vmatpush.msra.mxu0 %v840
        %932 = vmatpush.msra.mxu0 %v839
        %933 = vmatmul.f32.gmra.mxu0 %v834
        %v934 = vpop.f32.mrf.mxu0
        %v935 = vadd.f32 %v889, %v934
        %936 = vmatmul.f32.gmra.mxu0 %v836
        %v937 = vpop.f32.mrf.mxu0
        %v938 = vadd.f32 %v889, %v937
        %939 = vmatmul.f32.gmra.mxu0 %v838
        %v940 = vpop.f32.mrf.mxu0
        %v941 = vadd.f32 %v889, %v940
        %942 = vmatmul.f32.gmra.mxu0 %v837
        %v943 = vpop.f32.mrf.mxu0
        %v944 = vadd.f32 %v889, %v943
        %945 = vdwg.mxu0
        %946 = vmatpush.msra.mxu0 %v870
        %947 = vmatpush.msra.mxu0 %v869
        %948 = vmatpush.msra.mxu0 %v868
        %949 = vmatpush.msra.mxu0 %v867
        %950 = vmatpush.msra.mxu0 %v866
        %951 = vmatpush.msra.mxu0 %v865
        %952 = vmatpush.msra.mxu0 %v864
        %953 = vmatpush.msra.mxu0 %v863
        %954 = vmatpush.msra.mxu0 %v862
        %955 = vmatpush.msra.mxu0 %v861
        %956 = vmatpush.msra.mxu0 %v860
        %957 = vmatpush.msra.mxu0 %v859
        %958 = vmatpush.msra.mxu0 %v858
        %959 = vmatpush.msra.mxu0 %v857
        %960 = vmatpush.msra.mxu0 %v856
        %961 = vmatpush.msra.mxu0 %v855
        %962 = vmatmul.f32.gmra.mxu0 %v893
        %v963 = vpop.f32.mrf.mxu0
        %v964 = vadd.f32 %v935, %v963
        %965 = vmatmul.f32.gmra.mxu0 %v898
        %v966 = vpop.f32.mrf.mxu0
        %v967 = vadd.f32 %v938, %v966
        %968 = vmatmul.f32.gmra.mxu0 %v902
        %v969 = vpop.f32.mrf.mxu0
        %v970 = vadd.f32 %v941, %v969
        %971 = vmatmul.f32.gmra.mxu0 %v901
        %v972 = vpop.f32.mrf.mxu0
        %v973 = vadd.f32 %v944, %v972
        %974 = vdwg.mxu0
        %975 = vmatpush.msra.mxu0 %v886
        %976 = vmatpush.msra.mxu0 %v885
        %977 = vmatpush.msra.mxu0 %v884
        %978 = vmatpush.msra.mxu0 %v883
        %979 = vmatpush.msra.mxu0 %v882
        %980 = vmatpush.msra.mxu0 %v881
        %981 = vmatpush.msra.mxu0 %v880
        %982 = vmatpush.msra.mxu0 %v879
        %983 = vmatpush.msra.mxu0 %v878
        %984 = vmatpush.msra.mxu0 %v877
        %985 = vmatpush.msra.mxu0 %v876
        %986 = vmatpush.msra.mxu0 %v875
        %987 = vmatpush.msra.mxu0 %v874
        %988 = vmatpush.msra.mxu0 %v873
        %989 = vmatpush.msra.mxu0 %v872
        %990 = vmatpush.msra.mxu0 %v871
        %991 = vmatmul.f32.gmra.mxu0 %v896
        %v992 = vpop.f32.mrf.mxu0
        %v993 = vadd.f32 %v964, %v992
        %994 = vmatmul.f32.gmra.mxu0 %v900
        %v995 = vpop.f32.mrf.mxu0
        %v996 = vadd.f32 %v967, %v995
        %997 = vmatmul.f32.gmra.mxu0 %v904
        %v998 = vpop.f32.mrf.mxu0
        %v999 = vadd.f32 %v970, %v998
        %1000 = vmatmul.f32.gmra.mxu0 %v903
        %v1001 = vpop.f32.mrf.mxu0
        %v1002 = vadd.f32 %v973, %v1001
        %1003 = vdwg.mxu0
        %v1004 = vmax.f32 %v993, 0.0
        %v1005 = vmax.f32 %v996, 0.0
        %v1006 = vmax.f32 %v999, 0.0
        %v1007 = vmax.f32 %v1002, 0.0
        %v1008 = vld [vmem:[#allocation8] sm:$0xff]
        %v1009 = vld [vmem:[#allocation8 + $0x8] sm:$0xff]
        %v1010 = vld [vmem:[#allocation8 + $0x10] sm:$0xff]
        %v1011 = vld [vmem:[#allocation8 + $0x18] sm:$0xff]
        %v1012 = vld [vmem:[#allocation8 + $0x20] sm:$0xff]
        %v1013 = vld [vmem:[#allocation8 + $0x28] sm:$0xff]
        %v1014 = vld [vmem:[#allocation8 + $0x30] sm:$0xff]
        %v1015 = vld [vmem:[#allocation8 + $0x38] sm:$0xff]
        %v1016 = vld [vmem:[#allocation8 + $0x40] sm:$0xff]
        %v1017 = vld [vmem:[#allocation8 + $0x48] sm:$0xff]
        %v1018 = vld [vmem:[#allocation8 + $0x50] sm:$0xff]
        %v1019 = vld [vmem:[#allocation8 + $0x58] sm:$0xff]
        %v1020 = vld [vmem:[#allocation8 + $0x60] sm:$0xff]
        %v1021 = vld [vmem:[#allocation8 + $0x68] sm:$0xff]
        %v1022 = vld [vmem:[#allocation8 + $0x70] sm:$0xff]
        %v1023 = vld [vmem:[#allocation8 + $0x78] sm:$0xff]
        %v1024 = vld [vmem:[%s6] sm:$0x1]
        %v1026 = vperm.slane %v1024, 0
        %vm1028 = vcmask 1043456
        %v1029 = vrot.slane %v618, 4
        %v1030 = vrot.slane %v619, 4
        %v1031 = vsel %vm1028, %v1029, %v1030
        %v1032 = vrot.slane %v620, 4
        %v1033 = vsel %vm1028, %v1030, %v1032
        %v1034 = vrot.slane %v621, 4
        %v1035 = vsel %vm1028, %v1032, %v1034
        %1040 = vmatpush.msra.mxu0 %v1023
        %1041 = vmatpush.msra.mxu0 %v1022
        %1042 = vmatpush.msra.mxu0 %v1021
        %1043 = vmatpush.msra.mxu0 %v1020
        %1044 = vmatpush.msra.mxu0 %v1019
        %1045 = vmatpush.msra.mxu0 %v1018
        %1046 = vmatpush.msra.mxu0 %v1017
        %1047 = vmatpush.msra.mxu0 %v1016
        %1048 = vmatpush.msra.mxu0 %v1015
        %1049 = vmatpush.msra.mxu0 %v1014
        %1050 = vmatpush.msra.mxu0 %v1013
        %1051 = vmatpush.msra.mxu0 %v1012
        %1052 = vmatpush.msra.mxu0 %v1011
        %1053 = vmatpush.msra.mxu0 %v1010
        %1054 = vmatpush.msra.mxu0 %v1009
        %1055 = vmatpush.msra.mxu0 %v1008
        %1056 = vmatmul.f32.gmra.mxu0 %v1031
        %v1057 = vpop.f32.mrf.mxu0
        %v1058 = vadd.f32 %v1026, %v1057
        %1059 = vmatmul.f32.gmra.mxu0 %v1033
        %v1060 = vpop.f32.mrf.mxu0
        %v1061 = vadd.f32 %v1026, %v1060
        %1062 = vmatmul.f32.gmra.mxu0 %v1035
        %v1063 = vpop.f32.mrf.mxu0
        %v1064 = vadd.f32 %v1026, %v1063
        %1065 = vmatmul.f32.gmra.mxu0 %v1034
        %v1066 = vpop.f32.mrf.mxu0
        %v1067 = vadd.f32 %v1026, %v1066
        %1068 = vdwg.mxu0
        %v1069 = vadd.f32 %v1004, %v1058
        %v1070 = vadd.f32 %v1005, %v1061
        %v1071 = vadd.f32 %v1006, %v1064
        %v1072 = vadd.f32 %v1007, %v1067
        %v1073 = vmax.f32 %v1069, 0.0
        %v1074 = vmax.f32 %v1070, 0.0
        %v1075 = vmax.f32 %v1071, 0.0
        %v1076 = vmax.f32 %v1072, 0.0
        %v1081 = vrot.slane %v1073, 4
        %v1082 = vrot.slane %v1074, 4
        %v1083 = vsel %vm1028, %v1081, %v1082
        %v1084 = vrot.slane %v1075, 4
        %v1085 = vsel %vm1028, %v1082, %v1084
        %v1086 = vrot.slane %v1076, 4
        %v1087 = vsel %vm1028, %v1084, %v1086
        %v1092 = vsel %vm797, %v1081, 0.0
        %v1093 = vsel %vm798, %v1083, 0.0
        %v1094 = vsel %vm799, %v1085, 0.0
        %v1095 = vsel %vm800, %v1087, 0.0
        %v1100 = vrot.slane %v1092, 2
        %v1101 = vrot.slane %v1093, 2
        %v1102 = vsel %vm638, %v1100, %v1101
        %v1103 = vrot.slane %v1094, 2
        %v1104 = vsel %vm638, %v1101, %v1103
        %v1105 = vrot.slane %v1095, 2
        %v1106 = vsel %vm638, %v1103, %v1105
        %v1107 = vrot.slane %v1093, 4
        %v1108 = vrot.slane %v1094, 4
        %v1109 = vsel %vm1028, %v1107, %v1108
        %v1110 = vrot.slane %v1095, 4
        %v1111 = vsel %vm1028, %v1108, %v1110
        %v1112 = vld [vmem:[#allocation10] sm:$0xff]
        %v1113 = vld [vmem:[#allocation10 + $0x8] sm:$0xff]
        %v1114 = vld [vmem:[#allocation10 + $0x10] sm:$0xff]
        %v1115 = vld [vmem:[#allocation10 + $0x18] sm:$0xff]
        %v1116 = vld [vmem:[#allocation10 + $0x20] sm:$0xff]
        %v1117 = vld [vmem:[#allocation10 + $0x28] sm:$0xff]
        %v1118 = vld [vmem:[#allocation10 + $0x30] sm:$0xff]
        %v1119 = vld [vmem:[#allocation10 + $0x38] sm:$0xff]
        %v1120 = vld [vmem:[#allocation10 + $0x40] sm:$0xff]
        %v1121 = vld [vmem:[#allocation10 + $0x48] sm:$0xff]
        %v1122 = vld [vmem:[#allocation10 + $0x50] sm:$0xff]
        %v1123 = vld [vmem:[#allocation10 + $0x58] sm:$0xff]
        %v1124 = vld [vmem:[#allocation10 + $0x60] sm:$0xff]
        %v1125 = vld [vmem:[#allocation10 + $0x68] sm:$0xff]
        %v1126 = vld [vmem:[#allocation10 + $0x70] sm:$0xff]
        %v1127 = vld [vmem:[#allocation10 + $0x78] sm:$0xff]
        %v1128 = vld [vmem:[#allocation10 + $0x80] sm:$0xff]
        %v1129 = vld [vmem:[#allocation10 + $0x88] sm:$0xff]
        %v1130 = vld [vmem:[#allocation10 + $0x90] sm:$0xff]
        %v1131 = vld [vmem:[#allocation10 + $0x98] sm:$0xff]
        %v1132 = vld [vmem:[#allocation10 + $0xa0] sm:$0xff]
        %v1133 = vld [vmem:[#allocation10 + $0xa8] sm:$0xff]
        %v1134 = vld [vmem:[#allocation10 + $0xb0] sm:$0xff]
        %v1135 = vld [vmem:[#allocation10 + $0xb8] sm:$0xff]
        %v1136 = vld [vmem:[#allocation10 + $0xc0] sm:$0xff]
        %v1137 = vld [vmem:[#allocation10 + $0xc8] sm:$0xff]
        %v1138 = vld [vmem:[#allocation10 + $0xd0] sm:$0xff]
        %v1139 = vld [vmem:[#allocation10 + $0xd8] sm:$0xff]
        %v1140 = vld [vmem:[#allocation10 + $0xe0] sm:$0xff]
        %v1141 = vld [vmem:[#allocation10 + $0xe8] sm:$0xff]
        %v1142 = vld [vmem:[#allocation10 + $0xf0] sm:$0xff]
        %v1143 = vld [vmem:[#allocation10 + $0xf8] sm:$0xff]
        %v1144 = vld [vmem:[#allocation10 + $0x100] sm:$0xff]
        %v1145 = vld [vmem:[#allocation10 + $0x108] sm:$0xff]
        %v1146 = vld [vmem:[#allocation10 + $0x110] sm:$0xff]
        %v1147 = vld [vmem:[#allocation10 + $0x118] sm:$0xff]
        %v1148 = vld [vmem:[#allocation10 + $0x120] sm:$0xff]
        %v1149 = vld [vmem:[#allocation10 + $0x128] sm:$0xff]
        %v1150 = vld [vmem:[#allocation10 + $0x130] sm:$0xff]
        %v1151 = vld [vmem:[#allocation10 + $0x138] sm:$0xff]
        %v1152 = vld [vmem:[#allocation10 + $0x140] sm:$0xff]
        %v1153 = vld [vmem:[#allocation10 + $0x148] sm:$0xff]
        %v1154 = vld [vmem:[#allocation10 + $0x150] sm:$0xff]
        %v1155 = vld [vmem:[#allocation10 + $0x158] sm:$0xff]
        %v1156 = vld [vmem:[#allocation10 + $0x160] sm:$0xff]
        %v1157 = vld [vmem:[#allocation10 + $0x168] sm:$0xff]
        %v1158 = vld [vmem:[#allocation10 + $0x170] sm:$0xff]
        %v1159 = vld [vmem:[#allocation10 + $0x178] sm:$0xff]
        %v1160 = vld [vmem:[%s8] sm:$0x1]
        %v1162 = vperm.slane %v1160, 0
        %v1164 = vrot.slane %v1092, 4
        %v1165 = vsel %vm1028, %v1164, %v1107
        %v1166 = vrot.slane %v1102, 4
        %v1167 = vrot.slane %v1104, 4
        %v1168 = vsel %vm1028, %v1166, %v1167
        %v1169 = vrot.slane %v1107, 4
        %v1170 = vrot.slane %v1109, 4
        %v1171 = vsel %vm1028, %v1169, %v1170
        %v1172 = vrot.slane %v1106, 4
        %v1173 = vsel %vm1028, %v1167, %v1172
        %v1174 = vrot.slane %v1111, 4
        %v1175 = vsel %vm1028, %v1170, %v1174
        %v1176 = vrot.slane %v1105, 4
        %v1177 = vsel %vm1028, %v1172, %v1176
        %v1178 = vrot.slane %v1110, 4
        %v1179 = vsel %vm1028, %v1174, %v1178
        %1189 = vmatpush.msra.mxu0 %v1127
        %1190 = vmatpush.msra.mxu0 %v1126
        %1191 = vmatpush.msra.mxu0 %v1125
        %1192 = vmatpush.msra.mxu0 %v1124
        %1193 = vmatpush.msra.mxu0 %v1123
        %1194 = vmatpush.msra.mxu0 %v1122
        %1195 = vmatpush.msra.mxu0 %v1121
        %1196 = vmatpush.msra.mxu0 %v1120
        %1197 = vmatpush.msra.mxu0 %v1119
        %1198 = vmatpush.msra.mxu0 %v1118
        %1199 = vmatpush.msra.mxu0 %v1117
        %1200 = vmatpush.msra.mxu0 %v1116
        %1201 = vmatpush.msra.mxu0 %v1115
        %1202 = vmatpush.msra.mxu0 %v1114
        %1203 = vmatpush.msra.mxu0 %v1113
        %1204 = vmatpush.msra.mxu0 %v1112
        %1205 = vmatmul.f32.gmra.mxu0 %v1165
        %v1206 = vpop.f32.mrf.mxu0
        %v1207 = vadd.f32 %v1162, %v1206
        %1208 = vmatmul.f32.gmra.mxu0 %v1109
        %v1209 = vpop.f32.mrf.mxu0
        %v1210 = vadd.f32 %v1162, %v1209
        %1211 = vmatmul.f32.gmra.mxu0 %v1111
        %v1212 = vpop.f32.mrf.mxu0
        %v1213 = vadd.f32 %v1162, %v1212
        %1214 = vdwg.mxu0
        %1215 = vmatpush.msra.mxu0 %v1143
        %1216 = vmatpush.msra.mxu0 %v1142
        %1217 = vmatpush.msra.mxu0 %v1141
        %1218 = vmatpush.msra.mxu0 %v1140
        %1219 = vmatpush.msra.mxu0 %v1139
        %1220 = vmatpush.msra.mxu0 %v1138
        %1221 = vmatpush.msra.mxu0 %v1137
        %1222 = vmatpush.msra.mxu0 %v1136
        %1223 = vmatpush.msra.mxu0 %v1135
        %1224 = vmatpush.msra.mxu0 %v1134
        %1225 = vmatpush.msra.mxu0 %v1133
        %1226 = vmatpush.msra.mxu0 %v1132
        %1227 = vmatpush.msra.mxu0 %v1131
        %1228 = vmatpush.msra.mxu0 %v1130
        %1229 = vmatpush.msra.mxu0 %v1129
        %1230 = vmatpush.msra.mxu0 %v1128
        %1231 = vmatmul.f32.gmra.mxu0 %v1168
        %v1232 = vpop.f32.mrf.mxu0
        %v1233 = vadd.f32 %v1207, %v1232
        %1234 = vmatmul.f32.gmra.mxu0 %v1173
        %v1235 = vpop.f32.mrf.mxu0
        %v1236 = vadd.f32 %v1210, %v1235
        %1237 = vmatmul.f32.gmra.mxu0 %v1177
        %v1238 = vpop.f32.mrf.mxu0
        %v1239 = vadd.f32 %v1213, %v1238
        %1240 = vdwg.mxu0
        %1241 = vmatpush.msra.mxu0 %v1159
        %1242 = vmatpush.msra.mxu0 %v1158
        %1243 = vmatpush.msra.mxu0 %v1157
        %1244 = vmatpush.msra.mxu0 %v1156
        %1245 = vmatpush.msra.mxu0 %v1155
        %1246 = vmatpush.msra.mxu0 %v1154
        %1247 = vmatpush.msra.mxu0 %v1153
        %1248 = vmatpush.msra.mxu0 %v1152
        %1249 = vmatpush.msra.mxu0 %v1151
        %1250 = vmatpush.msra.mxu0 %v1150
        %1251 = vmatpush.msra.mxu0 %v1149
        %1252 = vmatpush.msra.mxu0 %v1148
        %1253 = vmatpush.msra.mxu0 %v1147
        %1254 = vmatpush.msra.mxu0 %v1146
        %1255 = vmatpush.msra.mxu0 %v1145
        %1256 = vmatpush.msra.mxu0 %v1144
        %1257 = vmatmul.f32.gmra.mxu0 %v1171
        %v1258 = vpop.f32.mrf.mxu0
        %v1259 = vadd.f32 %v1233, %v1258
        %1260 = vmatmul.f32.gmra.mxu0 %v1175
        %v1261 = vpop.f32.mrf.mxu0
        %v1262 = vadd.f32 %v1236, %v1261
        %1263 = vmatmul.f32.gmra.mxu0 %v1179
        %v1264 = vpop.f32.mrf.mxu0
        %v1265 = vadd.f32 %v1239, %v1264
        %1266 = vdwg.mxu0
        %v1267 = vmax.f32 %v1259, 0.0
        %v1268 = vmax.f32 %v1262, 0.0
        %v1269 = vmax.f32 %v1265, 0.0
        %v1270 = vsel %vm798, %v1267, 0.0
        %v1271 = vsel %vm799, %v1268, 0.0
        %v1272 = vsel %vm800, %v1269, 0.0
        %v1276 = vrot.slane %v1270, 2
        %v1277 = vrot.slane %v1271, 2
        %v1278 = vsel %vm638, %v1276, %v1277
        %v1279 = vrot.slane %v1272, 2
        %v1280 = vsel %vm638, %v1277, %v1279
        %v1284 = vrot.slane %v1270, 4
        %v1285 = vrot.slane %v1271, 4
        %v1286 = vsel %vm1028, %v1284, %v1285
        %v1287 = vrot.slane %v1272, 4
        %v1288 = vsel %vm1028, %v1285, %v1287
        %v1292 = vld [vmem:[#allocation11] sm:$0xff]
        %v1293 = vld [vmem:[#allocation11 + $0x8] sm:$0xff]
        %v1294 = vld [vmem:[#allocation11 + $0x10] sm:$0xff]
        %v1295 = vld [vmem:[#allocation11 + $0x18] sm:$0xff]
        %v1296 = vld [vmem:[#allocation11 + $0x20] sm:$0xff]
        %v1297 = vld [vmem:[#allocation11 + $0x28] sm:$0xff]
        %v1298 = vld [vmem:[#allocation11 + $0x30] sm:$0xff]
        %v1299 = vld [vmem:[#allocation11 + $0x38] sm:$0xff]
        %v1300 = vld [vmem:[#allocation11 + $0x40] sm:$0xff]
        %v1301 = vld [vmem:[#allocation11 + $0x48] sm:$0xff]
        %v1302 = vld [vmem:[#allocation11 + $0x50] sm:$0xff]
        %v1303 = vld [vmem:[#allocation11 + $0x58] sm:$0xff]
        %v1304 = vld [vmem:[#allocation11 + $0x60] sm:$0xff]
        %v1305 = vld [vmem:[#allocation11 + $0x68] sm:$0xff]
        %v1306 = vld [vmem:[#allocation11 + $0x70] sm:$0xff]
        %v1307 = vld [vmem:[#allocation11 + $0x78] sm:$0xff]
        %v1308 = vld [vmem:[#allocation11 + $0x80] sm:$0xff]
        %v1309 = vld [vmem:[#allocation11 + $0x88] sm:$0xff]
        %v1310 = vld [vmem:[#allocation11 + $0x90] sm:$0xff]
        %v1311 = vld [vmem:[#allocation11 + $0x98] sm:$0xff]
        %v1312 = vld [vmem:[#allocation11 + $0xa0] sm:$0xff]
        %v1313 = vld [vmem:[#allocation11 + $0xa8] sm:$0xff]
        %v1314 = vld [vmem:[#allocation11 + $0xb0] sm:$0xff]
        %v1315 = vld [vmem:[#allocation11 + $0xb8] sm:$0xff]
        %v1316 = vld [vmem:[#allocation11 + $0xc0] sm:$0xff]
        %v1317 = vld [vmem:[#allocation11 + $0xc8] sm:$0xff]
        %v1318 = vld [vmem:[#allocation11 + $0xd0] sm:$0xff]
        %v1319 = vld [vmem:[#allocation11 + $0xd8] sm:$0xff]
        %v1320 = vld [vmem:[#allocation11 + $0xe0] sm:$0xff]
        %v1321 = vld [vmem:[#allocation11 + $0xe8] sm:$0xff]
        %v1322 = vld [vmem:[#allocation11 + $0xf0] sm:$0xff]
        %v1323 = vld [vmem:[#allocation11 + $0xf8] sm:$0xff]
        %v1324 = vld [vmem:[#allocation11 + $0x100] sm:$0xff]
        %v1325 = vld [vmem:[#allocation11 + $0x108] sm:$0xff]
        %v1326 = vld [vmem:[#allocation11 + $0x110] sm:$0xff]
        %v1327 = vld [vmem:[#allocation11 + $0x118] sm:$0xff]
        %v1328 = vld [vmem:[#allocation11 + $0x120] sm:$0xff]
        %v1329 = vld [vmem:[#allocation11 + $0x128] sm:$0xff]
        %v1330 = vld [vmem:[#allocation11 + $0x130] sm:$0xff]
        %v1331 = vld [vmem:[#allocation11 + $0x138] sm:$0xff]
        %v1332 = vld [vmem:[#allocation11 + $0x140] sm:$0xff]
        %v1333 = vld [vmem:[#allocation11 + $0x148] sm:$0xff]
        %v1334 = vld [vmem:[#allocation11 + $0x150] sm:$0xff]
        %v1335 = vld [vmem:[#allocation11 + $0x158] sm:$0xff]
        %v1336 = vld [vmem:[#allocation11 + $0x160] sm:$0xff]
        %v1337 = vld [vmem:[#allocation11 + $0x168] sm:$0xff]
        %v1338 = vld [vmem:[#allocation11 + $0x170] sm:$0xff]
        %v1339 = vld [vmem:[#allocation11 + $0x178] sm:$0xff]
        %v1340 = vld [vmem:[%s10] sm:$0x1]
        %v1342 = vperm.slane %v1340, 0
        %1344 = vmatpush.msra.mxu0 %v1307
        %1345 = vmatpush.msra.mxu0 %v1306
        %1346 = vmatpush.msra.mxu0 %v1305
        %1347 = vmatpush.msra.mxu0 %v1304
        %1348 = vmatpush.msra.mxu0 %v1303
        %1349 = vmatpush.msra.mxu0 %v1302
        %1350 = vmatpush.msra.mxu0 %v1301
        %1351 = vmatpush.msra.mxu0 %v1300
        %1352 = vmatpush.msra.mxu0 %v1299
        %1353 = vmatpush.msra.mxu0 %v1298
        %1354 = vmatpush.msra.mxu0 %v1297
        %1355 = vmatpush.msra.mxu0 %v1296
        %1356 = vmatpush.msra.mxu0 %v1295
        %1357 = vmatpush.msra.mxu0 %v1294
        %1358 = vmatpush.msra.mxu0 %v1293
        %1359 = vmatpush.msra.mxu0 %v1292
        %1360 = vmatmul.f32.gmra.mxu0 %v1270
        %v1361 = vpop.f32.mrf.mxu0
        %v1362 = vadd.f32 %v1342, %v1361
        %1363 = vmatmul.f32.gmra.mxu0 %v1271
        %v1364 = vpop.f32.mrf.mxu0
        %v1365 = vadd.f32 %v1342, %v1364
        %1366 = vmatmul.f32.gmra.mxu0 %v1272
        %v1367 = vpop.f32.mrf.mxu0
        %v1368 = vadd.f32 %v1342, %v1367
        %1369 = vdwg.mxu0
        %1370 = vmatpush.msra.mxu0 %v1323
        %1371 = vmatpush.msra.mxu0 %v1322
        %1372 = vmatpush.msra.mxu0 %v1321
        %1373 = vmatpush.msra.mxu0 %v1320
        %1374 = vmatpush.msra.mxu0 %v1319
        %1375 = vmatpush.msra.mxu0 %v1318
        %1376 = vmatpush.msra.mxu0 %v1317
        %1377 = vmatpush.msra.mxu0 %v1316
        %1378 = vmatpush.msra.mxu0 %v1315
        %1379 = vmatpush.msra.mxu0 %v1314
        %1380 = vmatpush.msra.mxu0 %v1313
        %1381 = vmatpush.msra.mxu0 %v1312
        %1382 = vmatpush.msra.mxu0 %v1311
        %1383 = vmatpush.msra.mxu0 %v1310
        %1384 = vmatpush.msra.mxu0 %v1309
        %1385 = vmatpush.msra.mxu0 %v1308
        %1386 = vmatmul.f32.gmra.mxu0 %v1278
        %v1387 = vpop.f32.mrf.mxu0
        %v1388 = vadd.f32 %v1362, %v1387
        %1389 = vmatmul.f32.gmra.mxu0 %v1280
        %v1390 = vpop.f32.mrf.mxu0
        %v1391 = vadd.f32 %v1365, %v1390
        %1392 = vmatmul.f32.gmra.mxu0 %v1279
        %v1393 = vpop.f32.mrf.mxu0
        %v1394 = vadd.f32 %v1368, %v1393
        %1395 = vdwg.mxu0
        %1396 = vmatpush.msra.mxu0 %v1339
        %1397 = vmatpush.msra.mxu0 %v1338
        %1398 = vmatpush.msra.mxu0 %v1337
        %1399 = vmatpush.msra.mxu0 %v1336
        %1400 = vmatpush.msra.mxu0 %v1335
        %1401 = vmatpush.msra.mxu0 %v1334
        %1402 = vmatpush.msra.mxu0 %v1333
        %1403 = vmatpush.msra.mxu0 %v1332
        %1404 = vmatpush.msra.mxu0 %v1331
        %1405 = vmatpush.msra.mxu0 %v1330
        %1406 = vmatpush.msra.mxu0 %v1329
        %1407 = vmatpush.msra.mxu0 %v1328
        %1408 = vmatpush.msra.mxu0 %v1327
        %1409 = vmatpush.msra.mxu0 %v1326
        %1410 = vmatpush.msra.mxu0 %v1325
        %1411 = vmatpush.msra.mxu0 %v1324
        %1412 = vmatmul.f32.gmra.mxu0 %v1286
        %v1413 = vpop.f32.mrf.mxu0
        %v1414 = vadd.f32 %v1388, %v1413
        %1415 = vmatmul.f32.gmra.mxu0 %v1288
        %v1416 = vpop.f32.mrf.mxu0
        %v1417 = vadd.f32 %v1391, %v1416
        %1418 = vmatmul.f32.gmra.mxu0 %v1287
        %v1419 = vpop.f32.mrf.mxu0
        %v1420 = vadd.f32 %v1394, %v1419
        %1421 = vdwg.mxu0
        %v1422 = vmax.f32 %v1414, 0.0
        %v1423 = vmax.f32 %v1417, 0.0
        %v1424 = vmax.f32 %v1420, 0.0
        %v1425 = vadd.f32 %v1422, %v1074
        %v1426 = vadd.f32 %v1423, %v1075
        %v1427 = vadd.f32 %v1424, %v1076
        %v1428 = vmax.f32 %v1425, 0.0
        %v1429 = vmax.f32 %v1426, 0.0
        %v1430 = vmax.f32 %v1427, 0.0
        %v1431 = vld [vmem:[#allocation13] sm:$0xff]
        %v1432 = vld [vmem:[#allocation13 + $0x8] sm:$0xff]
        %v1433 = vld [vmem:[#allocation13 + $0x10] sm:$0xff]
        %v1434 = vld [vmem:[#allocation13 + $0x18] sm:$0xff]
        %v1435 = vld [vmem:[#allocation13 + $0x20] sm:$0xff]
        %v1436 = vld [vmem:[#allocation13 + $0x28] sm:$0xff]
        %v1437 = vld [vmem:[#allocation13 + $0x30] sm:$0xff]
        %v1438 = vld [vmem:[#allocation13 + $0x38] sm:$0xff]
        %v1439 = vld [vmem:[#allocation13 + $0x40] sm:$0xff]
        %v1440 = vld [vmem:[#allocation13 + $0x48] sm:$0xff]
        %v1441 = vld [vmem:[#allocation13 + $0x50] sm:$0xff]
        %v1442 = vld [vmem:[#allocation13 + $0x58] sm:$0xff]
        %v1443 = vld [vmem:[#allocation13 + $0x60] sm:$0xff]
        %v1444 = vld [vmem:[#allocation13 + $0x68] sm:$0xff]
        %v1445 = vld [vmem:[#allocation13 + $0x70] sm:$0xff]
        %v1446 = vld [vmem:[#allocation13 + $0x78] sm:$0xff]
        %v1447 = vld [vmem:[%s12] sm:$0x1]
        %v1449 = vperm.slane %v1447, 0
        %1451 = vmatpush.msra.mxu0 %v1446
        %1452 = vmatpush.msra.mxu0 %v1445
        %1453 = vmatpush.msra.mxu0 %v1444
        %1454 = vmatpush.msra.mxu0 %v1443
        %1455 = vmatpush.msra.mxu0 %v1442
        %1456 = vmatpush.msra.mxu0 %v1441
        %1457 = vmatpush.msra.mxu0 %v1440
        %1458 = vmatpush.msra.mxu0 %v1439
        %1459 = vmatpush.msra.mxu0 %v1438
        %1460 = vmatpush.msra.mxu0 %v1437
        %1461 = vmatpush.msra.mxu0 %v1436
        %1462 = vmatpush.msra.mxu0 %v1435
        %1463 = vmatpush.msra.mxu0 %v1434
        %1464 = vmatpush.msra.mxu0 %v1433
        %1465 = vmatpush.msra.mxu0 %v1432
        %1466 = vmatpush.msra.mxu0 %v1431
        %1467 = vmatmul.f32.gmra.mxu0 %v1428
        %v1468 = vpop.f32.mrf.mxu0
        %v1469 = vadd.f32 %v1449, %v1468
        %1470 = vmatmul.f32.gmra.mxu0 %v1429
        %v1471 = vpop.f32.mrf.mxu0
        %v1472 = vadd.f32 %v1449, %v1471
        %1473 = vmatmul.f32.gmra.mxu0 %v1430
        %v1474 = vpop.f32.mrf.mxu0
        %1475 = vdwg.mxu0
        %1476 = vmax.xlane.f32.xlu0 %v1469
        %v1477 = vpop.xlane.xlu0 %1476
        %1478 = vmax.xlane.f32.xlu0 %v1472
        %v1479 = vpop.xlane.xlu0 %1478
        %v1480 = vsub.f32 %v1469, %v1477
        %v1481 = vsub.f32 %v1472, %v1479
        %v1482 = vmul.f32 %v1480, 1.442695
        %v1483 = vpow.pop %v1482
        %v1484 = vmul.f32 %v1481, 1.442695
        %v1485 = vpow.pop %v1484
        %1486 = vadd.xlane.f32.xlu0 %v1483
        %v1487 = vpop.xlane.xlu0 %1486
        %1488 = vadd.xlane.f32.xlu0 %v1485
        %v1489 = vpop.xlane.xlu0 %1488
        %v1490 = vrcp.pop %v1487
        %v1491 = vmul.f32 %v1487, %v1490
        %v1492 = vsub.f32 1.0, %v1491
        %v1493 = vmul.f32 %v1490, %v1492
        %v1494 = vadd.f32 %v1490, %v1493
        %vm1495 = vweird.f32 %v1487
        %vm1496 = vweird.f32 %v1490
        %vm1497 = vmor %vm1495, %vm1496
        %v1498 = vsel %vm1497, %v1490, %v1494
        %v1499 = vand.u32 2147483647, %v1487
        %vm1500 = vcmp.eq.f32.partialorder %v1499, 8.507059e+37
        %v1501 = vand.u32 %v1487, 2147483648
        %v1502 = vor.u32 1.1754944e-38, %v1501
        %v1503 = vsel %vm1500, %v1502, %v1498
        %v1504 = vmul.f32 1.0, %v1503
        %v1505 = vrcp.pop %v1489
        %v1506 = vmul.f32 %v1489, %v1505
        %v1507 = vsub.f32 1.0, %v1506
        %v1508 = vmul.f32 %v1505, %v1507
        %v1509 = vadd.f32 %v1505, %v1508
        %vm1510 = vweird.f32 %v1489
        %vm1511 = vweird.f32 %v1505
        %vm1512 = vmor %vm1510, %vm1511
        %v1513 = vsel %vm1512, %v1505, %v1509
        %v1514 = vand.u32 2147483647, %v1489
        %vm1515 = vcmp.eq.f32.partialorder %v1514, 8.507059e+37
        %v1516 = vand.u32 %v1489, 2147483648
        %v1517 = vor.u32 1.1754944e-38, %v1516
        %v1518 = vsel %vm1515, %v1517, %v1513
        %v1519 = vmul.f32 1.0, %v1518
        %v1520 = vmul.f32 %v1483, %v1504
        %v1521 = vmul.f32 %v1485, %v1519
        %1522 = vst [vmem:[%s559] sm:$0xff] %v1520
        %1523 = vst [vmem:[%s559 + $0x8] sm:$0xff] %v1521
        %s1524 = sand.u32 %s319, 1
        %s1525 = scalar_lea.sflag [#allocation4], %s1524
        %s1526 = sand.u32 %s319, 1
        %s1527 = smul.addr %s1526, 16
        %s1528 = scalar_lea.vmem [#allocation14], %s1527
        // Predicated region
        $region101: #{tpu_custom_call.1} parent=71 // pred_check
          %p1529 = pneg %p329
        $region102: #{tpu_custom_call.1} parent=71 // pred_check_branch
          %1531 = sbr.rel (%p1529) target = $region104
        $region103: #{tpu_custom_call.1} parent=71 // pred_region
          %1533 = vsyncadd %s1525, 0
          %s1534 = smul.addr %s33, 2
          %s1535 = smul.addr %s1534, 8
          %s1536 = scalar_lea.hbm %s13, %s1535
          %s1537 = sshll.u32 %s1528, 4
          %s1538 = int_to_ptr.vmem [resolvable:$true] %s1537
          %s1539 = sshll.u32 %s1536, 4
          %s1540 = int_to_ptr.hbm [resolvable:$true] %s1539
          %1545 = dma.vmem_to_hbm [thread:$0]  %s1538, 256, %s1540, %s1525, 128, 128, 8
        $region104: #{tpu_custom_call.1} parent=71 // pred_fallthru
          _
      $region72: #{tpu_custom_call.1} parent=5 // pred_fallthru
        _
      %p1546 = scmp.le.s32.totalorder 2, %s28
      // Predicated region
      $region105: #{tpu_custom_call.1} parent=5 // pred_check
        %p1547 = pneg %p1546
      $region106: #{tpu_custom_call.1} parent=5 // pred_check_branch
        %1549 = sbr.rel (%p1547) target = $region108
      $region107: #{tpu_custom_call.1} parent=5 // pred_region
        %s1550 = ssub.s32 %s28, 2
        // Predicated region
        $region109: #{tpu_custom_call.1} parent=107 // pred_check
          %p1551 = pneg %p335
        $region110: #{tpu_custom_call.1} parent=107 // pred_check_branch
          %1553 = sbr.rel (%p1551) target = $region112
        $region111: #{tpu_custom_call.1} parent=107 // pred_region
          %s1554 = sand.u32 %s320, 1
          %s1555 = scalar_lea.sflag [#allocation4], %s1554
          %s1556 = sand.u32 %s320, 1
          %s1557 = smul.addr %s1556, 16
          %s1558 = scalar_lea.vmem [#allocation14], %s1557
          %1560 = dma.done %s1555, 256
        $region112: #{tpu_custom_call.1} parent=107 // pred_fallthru
          _
      $region108: #{tpu_custom_call.1} parent=5 // pred_fallthru
        _
    $region6: #{tpu_custom_call.1} parent=1 // loop_footer
      %s32 = sadd.s32 1, %s28
    $region7: #{tpu_custom_call.1} parent=1 // loop_footer_branch
      %27 = sbr.rel target = $region3
    $region8: #{tpu_custom_call.1} parent=1 // loop_exit
      _
    %1561 = vsyncpa [#allocation3], 1
    %s1562 = scalar_lea.sflag [#allocation3], 1
    %1563 = vsyncpa %s1562, 1
    %1564 = vsyncpa [#allocation6], 1
    %1565 = vsyncpa [#allocation9], 1
    %1566 = vsyncpa [#allocation12], 1
    %1567 = vsyncpa [#allocation4], 1
    %s1568 = scalar_lea.sflag [#allocation4], 1
    %1569 = vsyncpa %s1568, 1

</llo_original>
